<compile_context>
chip_gen: v7x
topology: tpu7x:2x2x1
jax: 0.10.0
libtpu: 0.0.40
codegen_flags: <defaults>
</compile_context>

<pallas_src>
import math
import jax
import jax.numpy as jnp
from jax.experimental import pallas as pl
from jax.experimental.pallas import tpu as pltpu

# ---- static configuration (small shapes consistent with the module) ----
B  = 2           # batch
C  = 8           # num_temporal_channels (height of the 2-D conv view)
T  = 16          # temporal_length
F  = 8           # num_freq_filters
CT = C * T       # flattened (channel, time) -> 128 lanes (lane-dense)
HT = T // 4      # time-mix FFN hidden dim
HF = C // 2      # freq-mix FFN hidden dim
LN_EPS = 1e-5
BN_EPS = 1e-5

# BatchNorm2d(1) parameters (deterministic, eval mode) folded to scale/shift.
_BN2D_GAMMA, _BN2D_BETA, _BN2D_MEAN, _BN2D_VAR = 1.2, -0.1, 0.05, 0.8
BN2D_SCALE = _BN2D_GAMMA / math.sqrt(_BN2D_VAR + BN_EPS)
BN2D_SHIFT = _BN2D_BETA - _BN2D_MEAN * BN2D_SCALE


def _swish(x):
    return x * jax.nn.sigmoid(x)


def _gelu(x):
    # PyTorch nn.GELU() default: exact erf formulation.
    return 0.5 * x * (1.0 + jax.lax.erf(x * (1.0 / math.sqrt(2.0))))


def _roll_lanes(x, off):
    """out[..., p] = x[..., (p + off) % n]  (static shift along the lane axis)."""
    n = x.shape[-1]
    off = off % n
    if off == 0:
        return x
    return jnp.concatenate([x[..., off:], x[..., :off]], axis=-1)


# ---------------------------------------------------------------------------
# Fused kernel: freq-enc -> temporal-enc -> mixer (+Swish) -> both skips.
# Everything operates on lane-dense (rows, C*T=128) slabs; flat index p = c*T+t.
#
#   mw_ref   (17, CT): rows 0-8  = 3x3 conv validity masks (in-kernel padding)
#                      rows 9-13 = (5,1) depthwise channel-boundary masks
#                      rows 14-16= temporal depthwise taps (time-mask folded in)
#   vecs_ref (10, CT): bn1s, bn1b, ln_t_g, ln_t_b, b1t(pad), b2t,
#                      ln_f_g, ln_f_b, b1f(pad), b2f  (all broadcast rows)
#   bigA_ref (CT,5CT): [wpwbig | avgT | avgC | w1t(pad) | w1f(pad)]
#   bigB_ref (2CT,CT): [w2t(pad) ; w2f(pad)]
# ---------------------------------------------------------------------------
def fused_kernel(x_ref, mw_ref, w1big_ref, wdcol_ref, wpsel_ref,
                 vecs_ref, bigA_ref, bigB_ref, out_ref):
    x = x_ref[...]                                               # (B, CT)

    # ---- stage 1: frequency-domain encoding --------------------------------
    # 3x3 conv (pad=1) via im2col: 9 masked lane-rolled copies (built once,
    # zero-padding expressed by the masks), then one MXU matmul for all
    # filters and both batches.  cols row index = 2*k + b.
    cols = jnp.concatenate(
        [_roll_lanes(x, (k // 3 - 1) * T + (k % 3 - 1)) * mw_ref[k:k + 1, :]
         for k in range(9)], axis=0)                             # (2*9, CT)
    y1 = _swish(jnp.dot(w1big_ref[...], cols,
                        preferred_element_type=jnp.float32))     # (B*F, CT)

    # depthwise (5,1) conv along the channel (height) axis, pad=(2,0)
    y2 = jnp.zeros_like(y1)
    for a in range(5):
        s = _roll_lanes(y1, (a - 2) * T) * mw_ref[9 + a:10 + a, :]
        y2 = y2 + wdcol_ref[:, a:a + 1] * s
    y2 = _swish(y2)

    # 1x1 pointwise conv F->1 (block-diag selector over batch), BN2d, Swish
    z = jnp.dot(wpsel_ref[...], y2, preferred_element_type=jnp.float32)   # (B, CT)
    z = _swish(z * BN2D_SCALE + BN2D_SHIFT)

    # ---- stage 2: temporal-domain encoding ----------------------------------
    # depthwise Conv1d (k=3, pad=1): per-channel weights with the time-boundary
    # mask already folded into the mw rows 14..16.
    dw = jnp.zeros_like(z)
    for tap in range(3):
        dw = dw + mw_ref[14 + tap:15 + tap, :] * _roll_lanes(z, tap - 1)
    # pointwise Conv1d C->C as (B,128)@(128,128) with kron(wpw^T, I_T)
    pw = jnp.dot(dw, bigA_ref[:, 0:CT], preferred_element_type=jnp.float32)
    y = _swish(pw * vecs_ref[0:1, :] + vecs_ref[1:2, :])         # BN1d (eval) + Swish

    # ---- stage 3: MLP mixer (block-diagonal / kron-expanded, 128-lane padded) ----
    # time_mix: LayerNorm(T) + FF(T -> T//4 -> T), residual
    avgT = bigA_ref[:, CT:2 * CT]
    mu = jnp.dot(y, avgT, preferred_element_type=jnp.float32)
    xc = y - mu
    var = jnp.dot(xc * xc, avgT, preferred_element_type=jnp.float32)
    u = xc * jax.lax.rsqrt(var + LN_EPS) * vecs_ref[2:3, :] + vecs_ref[3:4, :]
    h = _gelu(jnp.dot(u, bigA_ref[:, 3 * CT:4 * CT],
                      preferred_element_type=jnp.float32) + vecs_ref[4:5, :])
    v = jnp.dot(h, bigB_ref[0:CT, :],
                preferred_element_type=jnp.float32) + vecs_ref[5:6, :]
    x1 = y + v
    # freq_mix: LayerNorm(C) + FF(C -> C//2 -> C) on the transposed view
    avgC = bigA_ref[:, 2 * CT:3 * CT]
    mu2 = jnp.dot(x1, avgC, preferred_element_type=jnp.float32)
    xc2 = x1 - mu2
    var2 = jnp.dot(xc2 * xc2, avgC, preferred_element_type=jnp.float32)
    u2 = xc2 * jax.lax.rsqrt(var2 + LN_EPS) * vecs_ref[6:7, :] + vecs_ref[7:8, :]
    h2 = _gelu(jnp.dot(u2, bigA_ref[:, 4 * CT:5 * CT],
                       preferred_element_type=jnp.float32) + vecs_ref[8:9, :])
    v2 = jnp.dot(h2, bigB_ref[CT:2 * CT, :],
                 preferred_element_type=jnp.float32) + vecs_ref[9:10, :]
    x2 = x1 + v2

    # Swish after MixerBlock, then skipInput + skipInput2 + x
    out_ref[...] = x + z + _swish(x2)


# ---------------------------------------------------------------------------
# Wrapper: single pallas_call, lane-dense (B, C*T) in/out (wrapper-side reshape).
# ---------------------------------------------------------------------------
_KP_ORDER = ["mrows", "w1big", "wdcol", "wpsel", "vecs", "bigA", "bigB"]


def _full_spec(a):
    nd = a.ndim
    return pl.BlockSpec(a.shape, lambda i, _nd=nd: (0,) * _nd)


def conv_mixer_block(x, kp):
    assert x.shape == (B, C, T)
    xflat = x.reshape(B, CT)                      # lane-dense (2, 128) slab
    operands = [xflat] + [kp[name] for name in _KP_ORDER]
    out = pl.pallas_call(
        fused_kernel,
        grid=(1,),
        in_specs=[_full_spec(a) for a in operands],
        out_specs=pl.BlockSpec((B, CT), lambda i: (0, 0)),
        out_shape=jax.ShapeDtypeStruct((B, CT), jnp.float32),
        compiler_params=pltpu.CompilerParams(dimension_semantics=("arbitrary",)),
    )(*operands)
    return out.reshape(B, C, T)


# ---------------------------------------------------------------------------
# Raw parameters (PyTorch layout; nn.Linear weights stored pre-transposed (in, out)).
# ---------------------------------------------------------------------------
def init_raw_params(key):
    ks = jax.random.split(key, 24)
    n = lambda k, shape, s=0.2: jax.random.normal(k, shape, jnp.float32) * s

    w1 = n(ks[0], (F, 1, 3, 3))          # Conv2d(1, F, 3, pad=1, bias=False)
    wd = n(ks[1], (F, 1, 5, 1))          # depthwise Conv2d(F, F, (5,1), groups=F)
    wp = n(ks[2], (1, F, 1, 1))          # Conv2d(F, 1, 1, bias=False)
    wdw = n(ks[3], (C, 1, 3))            # depthwise Conv1d(C, C, 3, groups=C)
    wpw = n(ks[4], (C, C, 1))            # pointwise Conv1d(C, C, 1)

    # BatchNorm1d(C), eval mode, folded into scale/shift
    g1 = 1.0 + n(ks[5], (C,), 0.1)
    b1 = n(ks[6], (C,), 0.1)
    rm1 = n(ks[7], (C,), 0.1)
    rv1 = 0.5 + jnp.abs(n(ks[8], (C,), 0.2))
    bn1d_scale = g1 / jnp.sqrt(rv1 + BN_EPS)
    bn1d_shift = b1 - rm1 * bn1d_scale

    return dict(
        w1=w1, wd=wd, wp=wp, wdw=wdw, wpw=wpw,
        bn1d_scale=bn1d_scale, bn1d_shift=bn1d_shift,
        ln_t_g=1.0 + n(ks[9], (T,), 0.1), ln_t_b=n(ks[10], (T,), 0.1),
        w1t=n(ks[11], (T, HT)), b1t=n(ks[12], (HT,), 0.1),
        w2t=n(ks[13], (HT, T)), b2t=n(ks[14], (T,), 0.1),
        ln_f_g=1.0 + n(ks[15], (C,), 0.1), ln_f_b=n(ks[16], (C,), 0.1),
        w1f=n(ks[17], (C, HF)), b1f=n(ks[18], (HF,), 0.1),
        w2f=n(ks[19], (HF, C)), b2f=n(ks[20], (C,), 0.1),
    )


# ---------------------------------------------------------------------------
# One-time parameter preparation: flatten / kron-expand everything to the
# lane-dense (.., C*T) layout used inside the kernel, pad FFN hidden dims to
# 128 lanes, and pack everything into a handful of slabs (fewer DMAs).
# ---------------------------------------------------------------------------
def prepare_kernel_params(rp):
    f32 = jnp.float32
    eyeT = jnp.eye(T, dtype=f32)
    eyeC = jnp.eye(C, dtype=f32)
    cc = jnp.arange(CT) // T          # channel index per flat position
    tt = jnp.arange(CT) % T           # time index per flat position

    # 3x3 conv: validity masks (= in-kernel zero padding).
    m3 = []
    for k in range(9):
        a, d = k // 3 - 1, k % 3 - 1
        m3.append((cc + a >= 0) & (cc + a < C) & (tt + d >= 0) & (tt + d < T))
    mask3 = jnp.stack(m3).astype(f32)                                  # (9, CT)
    # depthwise (5,1) conv: channel-boundary masks.
    m5 = [((cc + (a - 2) >= 0) & (cc + (a - 2) < C)) for a in range(5)]
    mask5 = jnp.stack(m5).astype(f32)                                  # (5, CT)
    # temporal depthwise conv: per-channel taps with time-boundary mask folded in.
    wdwflat = []
    for tap in range(3):
        valid = ((tt + (tap - 1) >= 0) & (tt + (tap - 1) < T)).astype(f32)
        wdwflat.append(jnp.repeat(rp["wdw"][:, 0, tap], T) * valid)
    wdwflat = jnp.stack(wdwflat)                                       # (3, CT)
    mrows = jnp.concatenate([mask3, mask5, wdwflat], axis=0)           # (17, CT)

    # 3x3 conv block weight (rows = b*F+f, cols = 2*k+b).
    w1k = rp["w1"].reshape(F, 9)                                       # (F, 9)
    w1big = jnp.einsum("fk,bc->bfkc", w1k, jnp.eye(B, dtype=f32))
    w1big = w1big.reshape(B * F, 9 * B)                                # (B*F, 18)
    # depthwise (5,1) per-row (batch*filter) taps.
    wdcol = jnp.tile(rp["wd"].reshape(F, 5), (B, 1))                   # (B*F, 5)
    # 1x1 conv F->1, block-diagonal over batch.
    wpsel = jnp.kron(jnp.eye(B, dtype=f32), rp["wp"].reshape(1, F))    # (B, B*F)

    # BN1d (eval) scale/shift per flat position.
    bn1s = jnp.repeat(rp["bn1d_scale"], T).reshape(1, CT)
    bn1b = jnp.repeat(rp["bn1d_shift"], T).reshape(1, CT)

    # pointwise Conv1d and mixer matrices (kron / group-averaging).
    wpwbig = jnp.kron(rp["wpw"][:, :, 0].T, eyeT)                      # (CT, CT)
    avgT = jnp.kron(eyeC, jnp.full((T, T), 1.0 / T, f32))              # mean over T
    avgC = jnp.kron(jnp.full((C, C), 1.0 / C, f32), eyeT)              # mean over C

    lntg = jnp.tile(rp["ln_t_g"], C).reshape(1, CT)
    lntb = jnp.tile(rp["ln_t_b"], C).reshape(1, CT)
    w1tbig = jnp.kron(eyeC, rp["w1t"])                                 # (CT, C*HT)
    b1tbig = jnp.tile(rp["b1t"], C).reshape(1, C * HT)
    w2tbig = jnp.kron(eyeC, rp["w2t"])                                 # (C*HT, CT)
    b2tbig = jnp.tile(rp["b2t"], C).reshape(1, CT)

    lnfg = jnp.repeat(rp["ln_f_g"], T).reshape(1, CT)
    lnfb = jnp.repeat(rp["ln_f_b"], T).reshape(1, CT)
    w1fbig = jnp.kron(rp["w1f"], eyeT)                                 # (CT, HF*T)
    b1fbig = jnp.repeat(rp["b1f"], T).reshape(1, HF * T)
    w2fbig = jnp.kron(rp["w2f"], eyeT)                                 # (HF*T, CT)
    b2fbig = jnp.repeat(rp["b2f"], T).reshape(1, CT)

    # Zero-pad the FFN hidden dims to 128 lanes (pad columns/rows contribute
    # exactly zero: gelu(0)=0 and padded weight rows are zero).
    padlanes = lambda a: jnp.pad(a, ((0, 0), (0, CT - a.shape[1])))
    padrows = lambda a: jnp.pad(a, ((0, CT - a.shape[0]), (0, 0)))

    vecs = jnp.concatenate(
        [bn1s, bn1b, lntg, lntb, padlanes(b1tbig), b2tbig,
         lnfg, lnfb, padlanes(b1fbig), b2fbig], axis=0)                # (10, CT)
    bigA = jnp.concatenate(
        [wpwbig, avgT, avgC, padlanes(w1tbig), padlanes(w1fbig)], axis=1)  # (CT, 5*CT)
    bigB = jnp.concatenate([padrows(w2tbig), padrows(w2fbig)], axis=0)     # (2*CT, CT)

    return dict(mrows=mrows, w1big=w1big, wdcol=wdcol, wpsel=wpsel,
                vecs=vecs, bigA=bigA, bigB=bigB)


# ---------------------------------------------------------------------------
# Pure-JAX reference (mirrors the PyTorch module) used for a structural check.
# ---------------------------------------------------------------------------
def reference_forward(x, rp):
    xin = x                                                  # (B, C, T)
    # stage 1: Conv2d(1->F,3x3,pad1) / Swish / dw(5,1) / Swish / 1x1 / BN2d / Swish
    xp = jnp.pad(x, ((0, 0), (1, 1), (1, 1)))
    y1 = jnp.zeros((B, F, C, T), jnp.float32)
    for a in range(3):
        for d in range(3):
            y1 = y1 + rp["w1"][None, :, 0, a, d, None, None] * xp[:, None, a:a + C, d:d + T]
    y1 = _swish(y1)
    y1p = jnp.pad(y1, ((0, 0), (0, 0), (2, 2), (0, 0)))
    y2 = jnp.zeros_like(y1)
    for a in range(5):
        y2 = y2 + rp["wd"][None, :, 0, a, 0, None, None] * y1p[:, :, a:a + C, :]
    y2 = _swish(y2)
    z = jnp.einsum("bfct,f->bct", y2, rp["wp"][0, :, 0, 0])
    z = _swish(z * BN2D_SCALE + BN2D_SHIFT)
    # stage 2: SeparableConv1d / BN1d / Swish
    zp = jnp.pad(z, ((0, 0), (0, 0), (1, 1)))
    dw = jnp.zeros_like(z)
    for tap in range(3):
        dw = dw + rp["wdw"][None, :, 0, tap, None] * zp[:, :, tap:tap + T]
    pw = jnp.einsum("cd,bdt->bct", rp["wpw"][:, :, 0], dw)
    y = _swish(pw * rp["bn1d_scale"][None, :, None] + rp["bn1d_shift"][None, :, None])
    # stage 3: MixerBlock + Swish + skips
    mu = y.mean(-1, keepdims=True)
    var = ((y - mu) ** 2).mean(-1, keepdims=True)
    u = (y - mu) * jax.lax.rsqrt(var + LN_EPS) * rp["ln_t_g"] + rp["ln_t_b"]
    h = _gelu(u @ rp["w1t"] + rp["b1t"])
    v = h @ rp["w2t"] + rp["b2t"]
    x1 = y + v
    xt = jnp.swapaxes(x1, 1, 2)
    mu2 = xt.mean(-1, keepdims=True)
    var2 = ((xt - mu2) ** 2).mean(-1, keepdims=True)
    u2 = (xt - mu2) * jax.lax.rsqrt(var2 + LN_EPS) * rp["ln_f_g"] + rp["ln_f_b"]
    h2 = _gelu(u2 @ rp["w1f"] + rp["b1f"])
    v2 = h2 @ rp["w2f"] + rp["b2f"]
    x2 = x1 + jnp.swapaxes(v2, 1, 2)
    return xin + z + _swish(x2)


if __name__ == "__main__":
    key = jax.random.PRNGKey(0)
    kx, kparam = jax.random.split(key)
    x = jax.random.normal(kx, (B, C, T), jnp.float32)    # (batch, channels, time)
    raw = init_raw_params(kparam)
    kp = prepare_kernel_params(raw)                      # one-time weight expansion

    fn = jax.jit(conv_mixer_block)
    out = jax.block_until_ready(fn(x, kp))

    assert out.shape == (B, C, T) and out.dtype == jnp.float32
    assert bool(jnp.all(jnp.isfinite(out)))

    ref = jax.block_until_ready(jax.jit(reference_forward)(x, raw))
    assert bool(jnp.allclose(out, ref, rtol=5e-2, atol=5e-2)), \
        f"mismatch vs reference: max abs err = {float(jnp.max(jnp.abs(out - ref)))}"

    print("KERNEL_OK")
</pallas_src>

<mosaic_0001>
module attributes {stable_mosaic.version = 11 : i64} {
  func.func @fused_kernel(%arg0: i32, %arg1: memref<2x128xf32, #tpu.memory_space<vmem>>, %arg2: memref<17x128xf32, #tpu.memory_space<vmem>>, %arg3: memref<16x18xf32, #tpu.memory_space<vmem>>, %arg4: memref<16x5xf32, #tpu.memory_space<vmem>>, %arg5: memref<2x16xf32, #tpu.memory_space<vmem>>, %arg6: memref<10x128xf32, #tpu.memory_space<vmem>>, %arg7: memref<128x640xf32, #tpu.memory_space<vmem>>, %arg8: memref<256x128xf32, #tpu.memory_space<vmem>>, %arg9: memref<2x128xf32, #tpu.memory_space<vmem>>) attributes {dimension_semantics = [#tpu.dimension_semantics<arbitrary>], iteration_bounds = array<i64: 1>, scalar_prefetch = 0 : i64, scratch_operands = 0 : i64, tpu.core_type = #tpu.core_type<tc>, window_params = [{pipeline_mode = #tpu.pipeline_mode<synchronous>, transform_indices = @transform_0, window_bounds = array<i64: 2, 128>}, {pipeline_mode = #tpu.pipeline_mode<synchronous>, transform_indices = @transform_1, window_bounds = array<i64: 17, 128>}, {pipeline_mode = #tpu.pipeline_mode<synchronous>, transform_indices = @transform_2, window_bounds = array<i64: 16, 18>}, {pipeline_mode = #tpu.pipeline_mode<synchronous>, transform_indices = @transform_3, window_bounds = array<i64: 16, 5>}, {pipeline_mode = #tpu.pipeline_mode<synchronous>, transform_indices = @transform_4, window_bounds = array<i64: 2, 16>}, {pipeline_mode = #tpu.pipeline_mode<synchronous>, transform_indices = @transform_5, window_bounds = array<i64: 10, 128>}, {pipeline_mode = #tpu.pipeline_mode<synchronous>, transform_indices = @transform_6, window_bounds = array<i64: 128, 640>}, {pipeline_mode = #tpu.pipeline_mode<synchronous>, transform_indices = @transform_7, window_bounds = array<i64: 256, 128>}, {pipeline_mode = #tpu.pipeline_mode<synchronous>, transform_indices = @transform_8, window_bounds = array<i64: 2, 128>}]} {
    %c0 = arith.constant 0 : index
    %c0_0 = arith.constant 0 : index
    %0 = vector.load %arg1[%c0, %c0_0] : memref<2x128xf32, #tpu.memory_space<vmem>>, vector<2x128xf32>
    %1 = vector.extract_strided_slice %0 {offsets = [0, 111], sizes = [2, 17], strides = [1, 1]} : vector<2x128xf32> to vector<2x17xf32>
    %2 = vector.extract_strided_slice %0 {offsets = [0, 0], sizes = [2, 111], strides = [1, 1]} : vector<2x128xf32> to vector<2x111xf32>
    %3 = tpu.concatenate %1, %2 in 1 : vector<2x17xf32>, vector<2x111xf32> -> vector<2x128xf32>
    %c0_1 = arith.constant 0 : index
    %c0_2 = arith.constant 0 : index
    %4 = vector.load %arg2[%c0_1, %c0_2] : memref<17x128xf32, #tpu.memory_space<vmem>>, vector<1x128xf32>
    %5 = vector.broadcast %4 : vector<1x128xf32> to vector<2x128xf32>
    %6 = arith.mulf %3, %5 : vector<2x128xf32>
    %7 = vector.extract_strided_slice %0 {offsets = [0, 112], sizes = [2, 16], strides = [1, 1]} : vector<2x128xf32> to vector<2x16xf32>
    %8 = vector.extract_strided_slice %0 {offsets = [0, 0], sizes = [2, 112], strides = [1, 1]} : vector<2x128xf32> to vector<2x112xf32>
    %9 = tpu.concatenate %7, %8 in 1 : vector<2x16xf32>, vector<2x112xf32> -> vector<2x128xf32>
    %c1 = arith.constant 1 : index
    %c0_3 = arith.constant 0 : index
    %10 = vector.load %arg2[%c1, %c0_3] : memref<17x128xf32, #tpu.memory_space<vmem>>, vector<1x128xf32>
    %11 = vector.broadcast %10 : vector<1x128xf32> to vector<2x128xf32>
    %12 = arith.mulf %9, %11 : vector<2x128xf32>
    %13 = vector.extract_strided_slice %0 {offsets = [0, 113], sizes = [2, 15], strides = [1, 1]} : vector<2x128xf32> to vector<2x15xf32>
    %14 = vector.extract_strided_slice %0 {offsets = [0, 0], sizes = [2, 113], strides = [1, 1]} : vector<2x128xf32> to vector<2x113xf32>
    %15 = tpu.concatenate %13, %14 in 1 : vector<2x15xf32>, vector<2x113xf32> -> vector<2x128xf32>
    %c2 = arith.constant 2 : index
    %c0_4 = arith.constant 0 : index
    %16 = vector.load %arg2[%c2, %c0_4] : memref<17x128xf32, #tpu.memory_space<vmem>>, vector<1x128xf32>
    %17 = vector.broadcast %16 : vector<1x128xf32> to vector<2x128xf32>
    %18 = arith.mulf %15, %17 : vector<2x128xf32>
    %19 = vector.extract_strided_slice %0 {offsets = [0, 127], sizes = [2, 1], strides = [1, 1]} : vector<2x128xf32> to vector<2x1xf32>
    %20 = vector.extract_strided_slice %0 {offsets = [0, 0], sizes = [2, 127], strides = [1, 1]} : vector<2x128xf32> to vector<2x127xf32>
    %21 = tpu.concatenate %19, %20 in 1 : vector<2x1xf32>, vector<2x127xf32> -> vector<2x128xf32>
    %c3 = arith.constant 3 : index
    %c0_5 = arith.constant 0 : index
    %22 = vector.load %arg2[%c3, %c0_5] : memref<17x128xf32, #tpu.memory_space<vmem>>, vector<1x128xf32>
    %23 = vector.broadcast %22 : vector<1x128xf32> to vector<2x128xf32>
    %24 = arith.mulf %21, %23 : vector<2x128xf32>
    %c4 = arith.constant 4 : index
    %c0_6 = arith.constant 0 : index
    %25 = vector.load %arg2[%c4, %c0_6] : memref<17x128xf32, #tpu.memory_space<vmem>>, vector<1x128xf32>
    %26 = vector.broadcast %25 : vector<1x128xf32> to vector<2x128xf32>
    %27 = arith.mulf %0, %26 : vector<2x128xf32>
    %28 = vector.extract_strided_slice %0 {offsets = [0, 1], sizes = [2, 127], strides = [1, 1]} : vector<2x128xf32> to vector<2x127xf32>
    %29 = vector.extract_strided_slice %0 {offsets = [0, 0], sizes = [2, 1], strides = [1, 1]} : vector<2x128xf32> to vector<2x1xf32>
    %30 = tpu.concatenate %28, %29 in 1 : vector<2x127xf32>, vector<2x1xf32> -> vector<2x128xf32>
    %c5 = arith.constant 5 : index
    %c0_7 = arith.constant 0 : index
    %31 = vector.load %arg2[%c5, %c0_7] : memref<17x128xf32, #tpu.memory_space<vmem>>, vector<1x128xf32>
    %32 = vector.broadcast %31 : vector<1x128xf32> to vector<2x128xf32>
    %33 = arith.mulf %30, %32 : vector<2x128xf32>
    %34 = vector.extract_strided_slice %0 {offsets = [0, 15], sizes = [2, 113], strides = [1, 1]} : vector<2x128xf32> to vector<2x113xf32>
    %35 = vector.extract_strided_slice %0 {offsets = [0, 0], sizes = [2, 15], strides = [1, 1]} : vector<2x128xf32> to vector<2x15xf32>
    %36 = tpu.concatenate %34, %35 in 1 : vector<2x113xf32>, vector<2x15xf32> -> vector<2x128xf32>
    %c6 = arith.constant 6 : index
    %c0_8 = arith.constant 0 : index
    %37 = vector.load %arg2[%c6, %c0_8] : memref<17x128xf32, #tpu.memory_space<vmem>>, vector<1x128xf32>
    %38 = vector.broadcast %37 : vector<1x128xf32> to vector<2x128xf32>
    %39 = arith.mulf %36, %38 : vector<2x128xf32>
    %40 = vector.extract_strided_slice %0 {offsets = [0, 16], sizes = [2, 112], strides = [1, 1]} : vector<2x128xf32> to vector<2x112xf32>
    %41 = vector.extract_strided_slice %0 {offsets = [0, 0], sizes = [2, 16], strides = [1, 1]} : vector<2x128xf32> to vector<2x16xf32>
    %42 = tpu.concatenate %40, %41 in 1 : vector<2x112xf32>, vector<2x16xf32> -> vector<2x128xf32>
    %c7 = arith.constant 7 : index
    %c0_9 = arith.constant 0 : index
    %43 = vector.load %arg2[%c7, %c0_9] : memref<17x128xf32, #tpu.memory_space<vmem>>, vector<1x128xf32>
    %44 = vector.broadcast %43 : vector<1x128xf32> to vector<2x128xf32>
    %45 = arith.mulf %42, %44 : vector<2x128xf32>
    %46 = vector.extract_strided_slice %0 {offsets = [0, 17], sizes = [2, 111], strides = [1, 1]} : vector<2x128xf32> to vector<2x111xf32>
    %47 = vector.extract_strided_slice %0 {offsets = [0, 0], sizes = [2, 17], strides = [1, 1]} : vector<2x128xf32> to vector<2x17xf32>
    %48 = tpu.concatenate %46, %47 in 1 : vector<2x111xf32>, vector<2x17xf32> -> vector<2x128xf32>
    %c8 = arith.constant 8 : index
    %c0_10 = arith.constant 0 : index
    %49 = vector.load %arg2[%c8, %c0_10] : memref<17x128xf32, #tpu.memory_space<vmem>>, vector<1x128xf32>
    %50 = vector.broadcast %49 : vector<1x128xf32> to vector<2x128xf32>
    %51 = arith.mulf %48, %50 : vector<2x128xf32>
    %52 = tpu.concatenate %6, %12, %18, %24, %27, %33, %39, %45, %51 in 0 : vector<2x128xf32>, vector<2x128xf32>, vector<2x128xf32>, vector<2x128xf32>, vector<2x128xf32>, vector<2x128xf32>, vector<2x128xf32>, vector<2x128xf32>, vector<2x128xf32> -> vector<18x128xf32>
    %c0_11 = arith.constant 0 : index
    %c0_12 = arith.constant 0 : index
    %53 = vector.load %arg3[%c0_11, %c0_12] : memref<16x18xf32, #tpu.memory_space<vmem>>, vector<16x18xf32>
    %cst = arith.constant dense<0.000000e+00> : vector<16x128xf32>
    %54 = tpu.matmul %53, %52, %cst {dimension_numbers = #tpu.dot_dimension_numbers<[1], [0], [0], [1], [0, 0, 1, 1], [], []>} : vector<16x18xf32>, vector<18x128xf32>, vector<16x128xf32> -> vector<16x128xf32>
    %55 = arith.negf %54 : vector<16x128xf32>
    %56 = math.exp %55 : vector<16x128xf32>
    %cst_13 = arith.constant 1.000000e+00 : f32
    %57 = vector.broadcast %cst_13 : f32 to vector<16x128xf32>
    %58 = arith.addf %57, %56 : vector<16x128xf32>
    %59 = arith.divf %57, %58 : vector<16x128xf32>
    %60 = arith.mulf %54, %59 : vector<16x128xf32>
    %cst_14 = arith.constant 0.000000e+00 : f32
    %61 = vector.broadcast %cst_14 : f32 to vector<16x128xf32>
    %62 = vector.extract_strided_slice %60 {offsets = [0, 96], sizes = [16, 32], strides = [1, 1]} : vector<16x128xf32> to vector<16x32xf32>
    %63 = vector.extract_strided_slice %60 {offsets = [0, 0], sizes = [16, 96], strides = [1, 1]} : vector<16x128xf32> to vector<16x96xf32>
    %64 = tpu.concatenate %62, %63 in 1 : vector<16x32xf32>, vector<16x96xf32> -> vector<16x128xf32>
    %c9 = arith.constant 9 : index
    %c0_15 = arith.constant 0 : index
    %65 = vector.load %arg2[%c9, %c0_15] : memref<17x128xf32, #tpu.memory_space<vmem>>, vector<1x128xf32>
    %66 = vector.broadcast %65 : vector<1x128xf32> to vector<16x128xf32>
    %67 = arith.mulf %64, %66 : vector<16x128xf32>
    %c0_16 = arith.constant 0 : index
    %c0_17 = arith.constant 0 : index
    %68 = vector.load %arg4[%c0_16, %c0_17] : memref<16x5xf32, #tpu.memory_space<vmem>>, vector<16x1xf32>
    %69 = vector.broadcast %68 : vector<16x1xf32> to vector<16x128xf32>
    %70 = arith.mulf %69, %67 : vector<16x128xf32>
    %71 = arith.addf %61, %70 : vector<16x128xf32>
    %72 = vector.extract_strided_slice %60 {offsets = [0, 112], sizes = [16, 16], strides = [1, 1]} : vector<16x128xf32> to vector<16x16xf32>
    %73 = vector.extract_strided_slice %60 {offsets = [0, 0], sizes = [16, 112], strides = [1, 1]} : vector<16x128xf32> to vector<16x112xf32>
    %74 = tpu.concatenate %72, %73 in 1 : vector<16x16xf32>, vector<16x112xf32> -> vector<16x128xf32>
    %c10 = arith.constant 10 : index
    %c0_18 = arith.constant 0 : index
    %75 = vector.load %arg2[%c10, %c0_18] : memref<17x128xf32, #tpu.memory_space<vmem>>, vector<1x128xf32>
    %76 = vector.broadcast %75 : vector<1x128xf32> to vector<16x128xf32>
    %77 = arith.mulf %74, %76 : vector<16x128xf32>
    %c0_19 = arith.constant 0 : index
    %c1_20 = arith.constant 1 : index
    %78 = vector.load %arg4[%c0_19, %c1_20] : memref<16x5xf32, #tpu.memory_space<vmem>>, vector<16x1xf32>
    %79 = vector.broadcast %78 : vector<16x1xf32> to vector<16x128xf32>
    %80 = arith.mulf %79, %77 : vector<16x128xf32>
    %81 = arith.addf %71, %80 : vector<16x128xf32>
    %c11 = arith.constant 11 : index
    %c0_21 = arith.constant 0 : index
    %82 = vector.load %arg2[%c11, %c0_21] : memref<17x128xf32, #tpu.memory_space<vmem>>, vector<1x128xf32>
    %83 = vector.broadcast %82 : vector<1x128xf32> to vector<16x128xf32>
    %84 = arith.mulf %60, %83 : vector<16x128xf32>
    %c0_22 = arith.constant 0 : index
    %c2_23 = arith.constant 2 : index
    %85 = vector.load %arg4[%c0_22, %c2_23] : memref<16x5xf32, #tpu.memory_space<vmem>>, vector<16x1xf32>
    %86 = vector.broadcast %85 : vector<16x1xf32> to vector<16x128xf32>
    %87 = arith.mulf %86, %84 : vector<16x128xf32>
    %88 = arith.addf %81, %87 : vector<16x128xf32>
    %89 = vector.extract_strided_slice %60 {offsets = [0, 16], sizes = [16, 112], strides = [1, 1]} : vector<16x128xf32> to vector<16x112xf32>
    %90 = vector.extract_strided_slice %60 {offsets = [0, 0], sizes = [16, 16], strides = [1, 1]} : vector<16x128xf32> to vector<16x16xf32>
    %91 = tpu.concatenate %89, %90 in 1 : vector<16x112xf32>, vector<16x16xf32> -> vector<16x128xf32>
    %c12 = arith.constant 12 : index
    %c0_24 = arith.constant 0 : index
    %92 = vector.load %arg2[%c12, %c0_24] : memref<17x128xf32, #tpu.memory_space<vmem>>, vector<1x128xf32>
    %93 = vector.broadcast %92 : vector<1x128xf32> to vector<16x128xf32>
    %94 = arith.mulf %91, %93 : vector<16x128xf32>
    %c0_25 = arith.constant 0 : index
    %c3_26 = arith.constant 3 : index
    %95 = vector.load %arg4[%c0_25, %c3_26] : memref<16x5xf32, #tpu.memory_space<vmem>>, vector<16x1xf32>
    %96 = vector.broadcast %95 : vector<16x1xf32> to vector<16x128xf32>
    %97 = arith.mulf %96, %94 : vector<16x128xf32>
    %98 = arith.addf %88, %97 : vector<16x128xf32>
    %99 = vector.extract_strided_slice %60 {offsets = [0, 32], sizes = [16, 96], strides = [1, 1]} : vector<16x128xf32> to vector<16x96xf32>
    %100 = vector.extract_strided_slice %60 {offsets = [0, 0], sizes = [16, 32], strides = [1, 1]} : vector<16x128xf32> to vector<16x32xf32>
    %101 = tpu.concatenate %99, %100 in 1 : vector<16x96xf32>, vector<16x32xf32> -> vector<16x128xf32>
    %c13 = arith.constant 13 : index
    %c0_27 = arith.constant 0 : index
    %102 = vector.load %arg2[%c13, %c0_27] : memref<17x128xf32, #tpu.memory_space<vmem>>, vector<1x128xf32>
    %103 = vector.broadcast %102 : vector<1x128xf32> to vector<16x128xf32>
    %104 = arith.mulf %101, %103 : vector<16x128xf32>
    %c0_28 = arith.constant 0 : index
    %c4_29 = arith.constant 4 : index
    %105 = vector.load %arg4[%c0_28, %c4_29] : memref<16x5xf32, #tpu.memory_space<vmem>>, vector<16x1xf32>
    %106 = vector.broadcast %105 : vector<16x1xf32> to vector<16x128xf32>
    %107 = arith.mulf %106, %104 : vector<16x128xf32>
    %108 = arith.addf %98, %107 : vector<16x128xf32>
    %109 = arith.negf %108 : vector<16x128xf32>
    %110 = math.exp %109 : vector<16x128xf32>
    %cst_30 = arith.constant 1.000000e+00 : f32
    %111 = vector.broadcast %cst_30 : f32 to vector<16x128xf32>
    %112 = arith.addf %111, %110 : vector<16x128xf32>
    %113 = arith.divf %111, %112 : vector<16x128xf32>
    %114 = arith.mulf %108, %113 : vector<16x128xf32>
    %c0_31 = arith.constant 0 : index
    %c0_32 = arith.constant 0 : index
    %115 = vector.load %arg5[%c0_31, %c0_32] : memref<2x16xf32, #tpu.memory_space<vmem>>, vector<2x16xf32>
    %cst_33 = arith.constant dense<0.000000e+00> : vector<2x128xf32>
    %116 = tpu.matmul %115, %114, %cst_33 {dimension_numbers = #tpu.dot_dimension_numbers<[1], [0], [0], [1], [0, 0, 1, 1], [], []>} : vector<2x16xf32>, vector<16x128xf32>, vector<2x128xf32> -> vector<2x128xf32>
    %cst_34 = arith.constant 1.34163237 : f32
    %117 = vector.broadcast %cst_34 : f32 to vector<2x128xf32>
    %118 = arith.mulf %116, %117 : vector<2x128xf32>
    %cst_35 = arith.constant -0.167081624 : f32
    %119 = vector.broadcast %cst_35 : f32 to vector<2x128xf32>
    %120 = arith.addf %118, %119 : vector<2x128xf32>
    %121 = arith.negf %120 : vector<2x128xf32>
    %122 = math.exp %121 : vector<2x128xf32>
    %cst_36 = arith.constant 1.000000e+00 : f32
    %123 = vector.broadcast %cst_36 : f32 to vector<2x128xf32>
    %124 = arith.addf %123, %122 : vector<2x128xf32>
    %125 = arith.divf %123, %124 : vector<2x128xf32>
    %126 = arith.mulf %120, %125 : vector<2x128xf32>
    %cst_37 = arith.constant 0.000000e+00 : f32
    %127 = vector.broadcast %cst_37 : f32 to vector<2x128xf32>
    %c14 = arith.constant 14 : index
    %c0_38 = arith.constant 0 : index
    %128 = vector.load %arg2[%c14, %c0_38] : memref<17x128xf32, #tpu.memory_space<vmem>>, vector<1x128xf32>
    %129 = vector.extract_strided_slice %126 {offsets = [0, 127], sizes = [2, 1], strides = [1, 1]} : vector<2x128xf32> to vector<2x1xf32>
    %130 = vector.extract_strided_slice %126 {offsets = [0, 0], sizes = [2, 127], strides = [1, 1]} : vector<2x128xf32> to vector<2x127xf32>
    %131 = tpu.concatenate %129, %130 in 1 : vector<2x1xf32>, vector<2x127xf32> -> vector<2x128xf32>
    %132 = vector.broadcast %128 : vector<1x128xf32> to vector<2x128xf32>
    %133 = arith.mulf %132, %131 : vector<2x128xf32>
    %134 = arith.addf %127, %133 : vector<2x128xf32>
    %c15 = arith.constant 15 : index
    %c0_39 = arith.constant 0 : index
    %135 = vector.load %arg2[%c15, %c0_39] : memref<17x128xf32, #tpu.memory_space<vmem>>, vector<1x128xf32>
    %136 = vector.broadcast %135 : vector<1x128xf32> to vector<2x128xf32>
    %137 = arith.mulf %136, %126 : vector<2x128xf32>
    %138 = arith.addf %134, %137 : vector<2x128xf32>
    %c16 = arith.constant 16 : index
    %c0_40 = arith.constant 0 : index
    %139 = vector.load %arg2[%c16, %c0_40] : memref<17x128xf32, #tpu.memory_space<vmem>>, vector<1x128xf32>
    %140 = vector.extract_strided_slice %126 {offsets = [0, 1], sizes = [2, 127], strides = [1, 1]} : vector<2x128xf32> to vector<2x127xf32>
    %141 = vector.extract_strided_slice %126 {offsets = [0, 0], sizes = [2, 1], strides = [1, 1]} : vector<2x128xf32> to vector<2x1xf32>
    %142 = tpu.concatenate %140, %141 in 1 : vector<2x127xf32>, vector<2x1xf32> -> vector<2x128xf32>
    %143 = vector.broadcast %139 : vector<1x128xf32> to vector<2x128xf32>
    %144 = arith.mulf %143, %142 : vector<2x128xf32>
    %145 = arith.addf %138, %144 : vector<2x128xf32>
    %c0_41 = arith.constant 0 : index
    %c0_42 = arith.constant 0 : index
    %146 = vector.load %arg7[%c0_41, %c0_42] : memref<128x640xf32, #tpu.memory_space<vmem>>, vector<128x128xf32>
    %cst_43 = arith.constant dense<0.000000e+00> : vector<2x128xf32>
    %147 = tpu.matmul %145, %146, %cst_43 {dimension_numbers = #tpu.dot_dimension_numbers<[1], [0], [0], [1], [0, 0, 1, 1], [], []>} : vector<2x128xf32>, vector<128x128xf32>, vector<2x128xf32> -> vector<2x128xf32>
    %c0_44 = arith.constant 0 : index
    %c0_45 = arith.constant 0 : index
    %148 = vector.load %arg6[%c0_44, %c0_45] : memref<10x128xf32, #tpu.memory_space<vmem>>, vector<1x128xf32>
    %149 = vector.broadcast %148 : vector<1x128xf32> to vector<2x128xf32>
    %150 = arith.mulf %147, %149 : vector<2x128xf32>
    %c1_46 = arith.constant 1 : index
    %c0_47 = arith.constant 0 : index
    %151 = vector.load %arg6[%c1_46, %c0_47] : memref<10x128xf32, #tpu.memory_space<vmem>>, vector<1x128xf32>
    %152 = vector.broadcast %151 : vector<1x128xf32> to vector<2x128xf32>
    %153 = arith.addf %150, %152 : vector<2x128xf32>
    %154 = arith.negf %153 : vector<2x128xf32>
    %155 = math.exp %154 : vector<2x128xf32>
    %cst_48 = arith.constant 1.000000e+00 : f32
    %156 = vector.broadcast %cst_48 : f32 to vector<2x128xf32>
    %157 = arith.addf %156, %155 : vector<2x128xf32>
    %158 = arith.divf %156, %157 : vector<2x128xf32>
    %159 = arith.mulf %153, %158 : vector<2x128xf32>
    %c0_49 = arith.constant 0 : index
    %c128 = arith.constant 128 : index
    %160 = vector.load %arg7[%c0_49, %c128] : memref<128x640xf32, #tpu.memory_space<vmem>>, vector<128x128xf32>
    %cst_50 = arith.constant dense<0.000000e+00> : vector<2x128xf32>
    %161 = tpu.matmul %159, %160, %cst_50 {dimension_numbers = #tpu.dot_dimension_numbers<[1], [0], [0], [1], [0, 0, 1, 1], [], []>} : vector<2x128xf32>, vector<128x128xf32>, vector<2x128xf32> -> vector<2x128xf32>
    %162 = arith.subf %159, %161 : vector<2x128xf32>
    %163 = arith.mulf %162, %162 : vector<2x128xf32>
    %cst_51 = arith.constant dense<0.000000e+00> : vector<2x128xf32>
    %164 = tpu.matmul %163, %160, %cst_51 {dimension_numbers = #tpu.dot_dimension_numbers<[1], [0], [0], [1], [0, 0, 1, 1], [], []>} : vector<2x128xf32>, vector<128x128xf32>, vector<2x128xf32> -> vector<2x128xf32>
    %cst_52 = arith.constant 9.99999974E-6 : f32
    %165 = vector.broadcast %cst_52 : f32 to vector<2x128xf32>
    %166 = arith.addf %164, %165 : vector<2x128xf32>
    %167 = math.rsqrt %166 : vector<2x128xf32>
    %168 = arith.mulf %162, %167 : vector<2x128xf32>
    %c2_53 = arith.constant 2 : index
    %c0_54 = arith.constant 0 : index
    %169 = vector.load %arg6[%c2_53, %c0_54] : memref<10x128xf32, #tpu.memory_space<vmem>>, vector<1x128xf32>
    %170 = vector.broadcast %169 : vector<1x128xf32> to vector<2x128xf32>
    %171 = arith.mulf %168, %170 : vector<2x128xf32>
    %c3_55 = arith.constant 3 : index
    %c0_56 = arith.constant 0 : index
    %172 = vector.load %arg6[%c3_55, %c0_56] : memref<10x128xf32, #tpu.memory_space<vmem>>, vector<1x128xf32>
    %173 = vector.broadcast %172 : vector<1x128xf32> to vector<2x128xf32>
    %174 = arith.addf %171, %173 : vector<2x128xf32>
    %c0_57 = arith.constant 0 : index
    %c384 = arith.constant 384 : index
    %175 = vector.load %arg7[%c0_57, %c384] : memref<128x640xf32, #tpu.memory_space<vmem>>, vector<128x128xf32>
    %cst_58 = arith.constant dense<0.000000e+00> : vector<2x128xf32>
    %176 = tpu.matmul %174, %175, %cst_58 {dimension_numbers = #tpu.dot_dimension_numbers<[1], [0], [0], [1], [0, 0, 1, 1], [], []>} : vector<2x128xf32>, vector<128x128xf32>, vector<2x128xf32> -> vector<2x128xf32>
    %c4_59 = arith.constant 4 : index
    %c0_60 = arith.constant 0 : index
    %177 = vector.load %arg6[%c4_59, %c0_60] : memref<10x128xf32, #tpu.memory_space<vmem>>, vector<1x128xf32>
    %178 = vector.broadcast %177 : vector<1x128xf32> to vector<2x128xf32>
    %179 = arith.addf %176, %178 : vector<2x128xf32>
    %cst_61 = arith.constant 5.000000e-01 : f32
    %180 = vector.broadcast %cst_61 : f32 to vector<2x128xf32>
    %181 = arith.mulf %180, %179 : vector<2x128xf32>
    %cst_62 = arith.constant 0.707106769 : f32
    %182 = vector.broadcast %cst_62 : f32 to vector<2x128xf32>
    %183 = arith.mulf %179, %182 : vector<2x128xf32>
    %184 = math.erf %183 : vector<2x128xf32>
    %cst_63 = arith.constant 1.000000e+00 : f32
    %185 = vector.broadcast %cst_63 : f32 to vector<2x128xf32>
    %186 = arith.addf %185, %184 : vector<2x128xf32>
    %187 = arith.mulf %181, %186 : vector<2x128xf32>
    %c0_64 = arith.constant 0 : index
    %c0_65 = arith.constant 0 : index
    %188 = vector.load %arg8[%c0_64, %c0_65] : memref<256x128xf32, #tpu.memory_space<vmem>>, vector<128x128xf32>
    %cst_66 = arith.constant dense<0.000000e+00> : vector<2x128xf32>
    %189 = tpu.matmul %187, %188, %cst_66 {dimension_numbers = #tpu.dot_dimension_numbers<[1], [0], [0], [1], [0, 0, 1, 1], [], []>} : vector<2x128xf32>, vector<128x128xf32>, vector<2x128xf32> -> vector<2x128xf32>
    %c5_67 = arith.constant 5 : index
    %c0_68 = arith.constant 0 : index
    %190 = vector.load %arg6[%c5_67, %c0_68] : memref<10x128xf32, #tpu.memory_space<vmem>>, vector<1x128xf32>
    %191 = vector.broadcast %190 : vector<1x128xf32> to vector<2x128xf32>
    %192 = arith.addf %189, %191 : vector<2x128xf32>
    %193 = arith.addf %159, %192 : vector<2x128xf32>
    %c0_69 = arith.constant 0 : index
    %c256 = arith.constant 256 : index
    %194 = vector.load %arg7[%c0_69, %c256] : memref<128x640xf32, #tpu.memory_space<vmem>>, vector<128x128xf32>
    %cst_70 = arith.constant dense<0.000000e+00> : vector<2x128xf32>
    %195 = tpu.matmul %193, %194, %cst_70 {dimension_numbers = #tpu.dot_dimension_numbers<[1], [0], [0], [1], [0, 0, 1, 1], [], []>} : vector<2x128xf32>, vector<128x128xf32>, vector<2x128xf32> -> vector<2x128xf32>
    %196 = arith.subf %193, %195 : vector<2x128xf32>
    %197 = arith.mulf %196, %196 : vector<2x128xf32>
    %cst_71 = arith.constant dense<0.000000e+00> : vector<2x128xf32>
    %198 = tpu.matmul %197, %194, %cst_71 {dimension_numbers = #tpu.dot_dimension_numbers<[1], [0], [0], [1], [0, 0, 1, 1], [], []>} : vector<2x128xf32>, vector<128x128xf32>, vector<2x128xf32> -> vector<2x128xf32>
    %cst_72 = arith.constant 9.99999974E-6 : f32
    %199 = vector.broadcast %cst_72 : f32 to vector<2x128xf32>
    %200 = arith.addf %198, %199 : vector<2x128xf32>
    %201 = math.rsqrt %200 : vector<2x128xf32>
    %202 = arith.mulf %196, %201 : vector<2x128xf32>
    %c6_73 = arith.constant 6 : index
    %c0_74 = arith.constant 0 : index
    %203 = vector.load %arg6[%c6_73, %c0_74] : memref<10x128xf32, #tpu.memory_space<vmem>>, vector<1x128xf32>
    %204 = vector.broadcast %203 : vector<1x128xf32> to vector<2x128xf32>
    %205 = arith.mulf %202, %204 : vector<2x128xf32>
    %c7_75 = arith.constant 7 : index
    %c0_76 = arith.constant 0 : index
    %206 = vector.load %arg6[%c7_75, %c0_76] : memref<10x128xf32, #tpu.memory_space<vmem>>, vector<1x128xf32>
    %207 = vector.broadcast %206 : vector<1x128xf32> to vector<2x128xf32>
    %208 = arith.addf %205, %207 : vector<2x128xf32>
    %c0_77 = arith.constant 0 : index
    %c512 = arith.constant 512 : index
    %209 = vector.load %arg7[%c0_77, %c512] : memref<128x640xf32, #tpu.memory_space<vmem>>, vector<128x128xf32>
    %cst_78 = arith.constant dense<0.000000e+00> : vector<2x128xf32>
    %210 = tpu.matmul %208, %209, %cst_78 {dimension_numbers = #tpu.dot_dimension_numbers<[1], [0], [0], [1], [0, 0, 1, 1], [], []>} : vector<2x128xf32>, vector<128x128xf32>, vector<2x128xf32> -> vector<2x128xf32>
    %c8_79 = arith.constant 8 : index
    %c0_80 = arith.constant 0 : index
    %211 = vector.load %arg6[%c8_79, %c0_80] : memref<10x128xf32, #tpu.memory_space<vmem>>, vector<1x128xf32>
    %212 = vector.broadcast %211 : vector<1x128xf32> to vector<2x128xf32>
    %213 = arith.addf %210, %212 : vector<2x128xf32>
    %cst_81 = arith.constant 5.000000e-01 : f32
    %214 = vector.broadcast %cst_81 : f32 to vector<2x128xf32>
    %215 = arith.mulf %214, %213 : vector<2x128xf32>
    %cst_82 = arith.constant 0.707106769 : f32
    %216 = vector.broadcast %cst_82 : f32 to vector<2x128xf32>
    %217 = arith.mulf %213, %216 : vector<2x128xf32>
    %218 = math.erf %217 : vector<2x128xf32>
    %cst_83 = arith.constant 1.000000e+00 : f32
    %219 = vector.broadcast %cst_83 : f32 to vector<2x128xf32>
    %220 = arith.addf %219, %218 : vector<2x128xf32>
    %221 = arith.mulf %215, %220 : vector<2x128xf32>
    %c128_84 = arith.constant 128 : index
    %c0_85 = arith.constant 0 : index
    %222 = vector.load %arg8[%c128_84, %c0_85] : memref<256x128xf32, #tpu.memory_space<vmem>>, vector<128x128xf32>
    %cst_86 = arith.constant dense<0.000000e+00> : vector<2x128xf32>
    %223 = tpu.matmul %221, %222, %cst_86 {dimension_numbers = #tpu.dot_dimension_numbers<[1], [0], [0], [1], [0, 0, 1, 1], [], []>} : vector<2x128xf32>, vector<128x128xf32>, vector<2x128xf32> -> vector<2x128xf32>
    %c9_87 = arith.constant 9 : index
    %c0_88 = arith.constant 0 : index
    %224 = vector.load %arg6[%c9_87, %c0_88] : memref<10x128xf32, #tpu.memory_space<vmem>>, vector<1x128xf32>
    %225 = vector.broadcast %224 : vector<1x128xf32> to vector<2x128xf32>
    %226 = arith.addf %223, %225 : vector<2x128xf32>
    %227 = arith.addf %193, %226 : vector<2x128xf32>
    %228 = arith.addf %0, %126 : vector<2x128xf32>
    %229 = arith.negf %227 : vector<2x128xf32>
    %230 = math.exp %229 : vector<2x128xf32>
    %cst_89 = arith.constant 1.000000e+00 : f32
    %231 = vector.broadcast %cst_89 : f32 to vector<2x128xf32>
    %232 = arith.addf %231, %230 : vector<2x128xf32>
    %233 = arith.divf %231, %232 : vector<2x128xf32>
    %234 = arith.mulf %227, %233 : vector<2x128xf32>
    %235 = arith.addf %228, %234 : vector<2x128xf32>
    %c0_90 = arith.constant 0 : index
    %c0_91 = arith.constant 0 : index
    %236 = vector.load %arg9[%c0_90, %c0_91] : memref<2x128xf32, #tpu.memory_space<vmem>>, vector<2x128xf32>
    tpu.vector_store %arg9[%c0_90, %c0_91], %235 {strides = array<i32>} : memref<2x128xf32, #tpu.memory_space<vmem>>, vector<2x128xf32>,
    return
  }
  func.func @transform_0(%arg0: i32) -> (i32, i32) {
    %c0_i32 = arith.constant 0 : i32
    %c0_i32_0 = arith.constant 0 : i32
    %c0_i32_1 = arith.constant 0 : i32
    return %c0_i32, %c0_i32_0 : i32, i32
  }
  func.func @transform_1(%arg0: i32) -> (i32, i32) {
    %c0_i32 = arith.constant 0 : i32
    %c0_i32_0 = arith.constant 0 : i32
    %c0_i32_1 = arith.constant 0 : i32
    return %c0_i32, %c0_i32_0 : i32, i32
  }
  func.func @transform_2(%arg0: i32) -> (i32, i32) {
    %c0_i32 = arith.constant 0 : i32
    %c0_i32_0 = arith.constant 0 : i32
    %c0_i32_1 = arith.constant 0 : i32
    return %c0_i32, %c0_i32_0 : i32, i32
  }
  func.func @transform_3(%arg0: i32) -> (i32, i32) {
    %c0_i32 = arith.constant 0 : i32
    %c0_i32_0 = arith.constant 0 : i32
    %c0_i32_1 = arith.constant 0 : i32
    return %c0_i32, %c0_i32_0 : i32, i32
  }
  func.func @transform_4(%arg0: i32) -> (i32, i32) {
    %c0_i32 = arith.constant 0 : i32
    %c0_i32_0 = arith.constant 0 : i32
    %c0_i32_1 = arith.constant 0 : i32
    return %c0_i32, %c0_i32_0 : i32, i32
  }
  func.func @transform_5(%arg0: i32) -> (i32, i32) {
    %c0_i32 = arith.constant 0 : i32
    %c0_i32_0 = arith.constant 0 : i32
    %c0_i32_1 = arith.constant 0 : i32
    return %c0_i32, %c0_i32_0 : i32, i32
  }
  func.func @transform_6(%arg0: i32) -> (i32, i32) {
    %c0_i32 = arith.constant 0 : i32
    %c0_i32_0 = arith.constant 0 : i32
    %c0_i32_1 = arith.constant 0 : i32
    return %c0_i32, %c0_i32_0 : i32, i32
  }
  func.func @transform_7(%arg0: i32) -> (i32, i32) {
    %c0_i32 = arith.constant 0 : i32
    %c0_i32_0 = arith.constant 0 : i32
    %c0_i32_1 = arith.constant 0 : i32
    return %c0_i32, %c0_i32_0 : i32, i32
  }
  func.func @transform_8(%arg0: i32) -> (i32, i32) {
    %c0_i32 = arith.constant 0 : i32
    %c0_i32_0 = arith.constant 0 : i32
    %c0_i32_1 = arith.constant 0 : i32
    return %c0_i32, %c0_i32_0 : i32, i32
  }
}

</mosaic_0001>

<llo_original>
// kernel: conv_mixer_block.1
$region0: #{conv_mixer_block.1}
  #allocation0 [shape = 'u32[]', space=smem, size = 0x4, offset = 0x4, fixed_abs, tag = 'smem constant byte address 0x4 - core index']
  #allocation1 [shape = 'u32[144,128]{1,0:T(1,128)}', space=vmem, size = 0x12000, scoped, tag = 'internal scratch']
  %s0 = inlined_call_operand.vmem [shape: f32[2,128], index: 0, kind: input, shape index: {}]
  %s1 = inlined_call_operand.vmem [shape: f32[17,128], index: 1, kind: input, shape index: {}]
  %s2 = inlined_call_operand.vmem [shape: f32[16,18], index: 2, kind: input, shape index: {}]
  %s3 = inlined_call_operand.vmem [shape: f32[16,5], index: 3, kind: input, shape index: {}]
  %s4 = inlined_call_operand.vmem [shape: f32[2,16], index: 4, kind: input, shape index: {}]
  %s5 = inlined_call_operand.vmem [shape: f32[10,128], index: 5, kind: input, shape index: {}]
  %s6 = inlined_call_operand.hbm [shape: f32[128,640], index: 6, kind: input, shape index: {}]
  %s7 = inlined_call_operand.hbm [shape: f32[256,128], index: 7, kind: input, shape index: {}]
  %s8 = inlined_call_operand.vmem [shape: f32[2,128], index: 8, kind: output, shape index: {}]
  %s9 = sld [smem:[#allocation0]]
  $region50: #{conv_mixer_block.1} parent=0
    _
  %s11 = ssub.s32 1, %s9
  %s12 = scalar_select 0, %s11, %s9
  $region1: #{conv_mixer_block.1} parent=0
    #allocation2 [shape = 'u8[327680]{0}', space=vmem, size = 0x50000, scoped, tag = 'input window, operand 6, single buffered']
    #allocation3 [shape = 's32[1]{0}', space=sflag, size = 0x4, scoped, tag = 'scoped memory for conv_mixer_block.1']
    #allocation4 [shape = 'u8[131072]{0}', space=vmem, size = 0x20000, scoped, tag = 'input window, operand 7, single buffered']
    #allocation5 [shape = 's32[1]{0}', space=sflag, size = 0x4, scoped, tag = 'scoped memory for conv_mixer_block.1']
    %13 = vsyncpa [#allocation3], 0
    %14 = vsyncpa [#allocation5], 0
    // Predicated region
    $region2: #{conv_mixer_block.1} parent=1 // pred_check
      _
    $region3: #{conv_mixer_block.1} parent=1 // pred_check_branch
      %16 = sbr.rel (0) target = $region5
    $region4: #{conv_mixer_block.1} parent=1 // pred_region
      _
    $region5: #{conv_mixer_block.1} parent=1 // pred_fallthru
      _
    // Predicated region
    $region6: #{conv_mixer_block.1} parent=1 // pred_check
      _
    $region7: #{conv_mixer_block.1} parent=1 // pred_check_branch
      %18 = sbr.rel (0) target = $region9
    $region8: #{conv_mixer_block.1} parent=1 // pred_region
      _
    $region9: #{conv_mixer_block.1} parent=1 // pred_fallthru
      _
    // Predicated region
    $region10: #{conv_mixer_block.1} parent=1 // pred_check
      _
    $region11: #{conv_mixer_block.1} parent=1 // pred_check_branch
      %20 = sbr.rel (0) target = $region13
    $region12: #{conv_mixer_block.1} parent=1 // pred_region
      _
    $region13: #{conv_mixer_block.1} parent=1 // pred_fallthru
      _
    // Predicated region
    $region14: #{conv_mixer_block.1} parent=1 // pred_check
      _
    $region15: #{conv_mixer_block.1} parent=1 // pred_check_branch
      %22 = sbr.rel (0) target = $region17
    $region16: #{conv_mixer_block.1} parent=1 // pred_region
      _
    $region17: #{conv_mixer_block.1} parent=1 // pred_fallthru
      _
    // Predicated region
    $region18: #{conv_mixer_block.1} parent=1 // pred_check
      _
    $region19: #{conv_mixer_block.1} parent=1 // pred_check_branch
      %24 = sbr.rel (0) target = $region21
    $region20: #{conv_mixer_block.1} parent=1 // pred_region
      _
    $region21: #{conv_mixer_block.1} parent=1 // pred_fallthru
      _
    // Predicated region
    $region22: #{conv_mixer_block.1} parent=1 // pred_check
      _
    $region23: #{conv_mixer_block.1} parent=1 // pred_check_branch
      %26 = sbr.rel (0) target = $region25
    $region24: #{conv_mixer_block.1} parent=1 // pred_region
      _
    $region25: #{conv_mixer_block.1} parent=1 // pred_fallthru
      _
    // Predicated region
    $region26: #{conv_mixer_block.1} parent=1 // pred_check
      _
    $region27: #{conv_mixer_block.1} parent=1 // pred_check_branch
      %28 = sbr.rel (0) target = $region29
    $region28: #{conv_mixer_block.1} parent=1 // pred_region
      %s30 = ssub.s32 10240, 10240
      %31 = vsyncadd [#allocation3], %s30
      %s32 = sshll.u32 [#allocation2], 4
      %s33 = int_to_ptr.vmem [resolvable:$true] %s32
      %38 = dma.hbm_to_vmem [thread:$0]  %s6, 10240, %s33, [#allocation3], 640, 640, 40
    $region29: #{conv_mixer_block.1} parent=1 // pred_fallthru
      _
    // Predicated region
    $region30: #{conv_mixer_block.1} parent=1 // pred_check
      _
    $region31: #{conv_mixer_block.1} parent=1 // pred_check_branch
      %40 = sbr.rel (0) target = $region33
    $region32: #{conv_mixer_block.1} parent=1 // pred_region
      %s42 = ssub.s32 4096, 4096
      %43 = vsyncadd [#allocation5], %s42
      %s44 = sshll.u32 [#allocation4], 4
      %s45 = int_to_ptr.vmem [resolvable:$true] %s44
      %50 = dma.hbm_to_vmem [thread:$0]  %s7, 4096, %s45, [#allocation5], 128, 128, 8
    $region33: #{conv_mixer_block.1} parent=1 // pred_fallthru
      _
    // Predicated region
    $region34: #{conv_mixer_block.1} parent=1 // pred_check
      _
    $region35: #{conv_mixer_block.1} parent=1 // pred_check_branch
      %52 = sbr.rel (0) target = $region37
    $region36: #{conv_mixer_block.1} parent=1 // pred_region
      %53 = dma.done [#allocation3], 10240
    $region37: #{conv_mixer_block.1} parent=1 // pred_fallthru
      _
    // Predicated region
    $region38: #{conv_mixer_block.1} parent=1 // pred_check
      _
    $region39: #{conv_mixer_block.1} parent=1 // pred_check_branch
      %55 = sbr.rel (0) target = $region41
    $region40: #{conv_mixer_block.1} parent=1 // pred_region
      %56 = dma.done [#allocation5], 4096
    $region41: #{conv_mixer_block.1} parent=1 // pred_fallthru
      _
    %v57 = vld [vmem:[%s0] sm:$0x3]
    %59 = vrot.lane.b32.xlu0 %v57, 17
    %v60 = vpop.permute.xlu0 %59
    %v62 = vld [vmem:[%s1] sm:$0x1]
    %v63 = vlaneseq
    %v64 = vshrl.u32 %v63, 7
    %v65 = vsub.s32 0, %v64
    %v66 = vrot.slane %v62, %v65
    %v67 = vmul.f32 %v60, %v66
    %68 = vrot.lane.b32.xlu0 %v57, 16
    %v69 = vpop.permute.xlu0 %68
    %vm71 = vcmask 130048
    %v72 = vld [vmem:[%s1 + $0x1] sm:$0x1]
    %v73 = vlaneseq
    %v74 = vshrl.u32 %v73, 7
    %v75 = vsub.s32 0, %v74
    %v76 = vrot.slane %v72, %v75
    %v77 = vmul.f32 %v69, %v76
    %78 = vrot.lane.b32.xlu0 %v57, 15
    %v79 = vpop.permute.xlu0 %78
    %v81 = vld [vmem:[%s1 + $0x2] sm:$0x1]
    %v82 = vlaneseq
    %v83 = vshrl.u32 %v82, 7
    %v84 = vsub.s32 0, %v83
    %v85 = vrot.slane %v81, %v84
    %v86 = vmul.f32 %v79, %v85
    %87 = vrot.lane.b32.xlu0 %v57, 1
    %v88 = vpop.permute.xlu0 %87
    %v90 = vld [vmem:[%s1 + $0x3] sm:$0x1]
    %v91 = vlaneseq
    %v92 = vshrl.u32 %v91, 7
    %v93 = vsub.s32 0, %v92
    %v94 = vrot.slane %v90, %v93
    %v95 = vmul.f32 %v88, %v94
    %v96 = vld [vmem:[%s1 + $0x4] sm:$0x1]
    %v97 = vlaneseq
    %v98 = vshrl.u32 %v97, 7
    %v99 = vsub.s32 0, %v98
    %v100 = vrot.slane %v96, %v99
    %v101 = vmul.f32 %v57, %v100
    %102 = vrot.lane.b32.xlu0 %v57, 127
    %v103 = vpop.permute.xlu0 %102
    %v105 = vld [vmem:[%s1 + $0x5] sm:$0x1]
    %v106 = vlaneseq
    %v107 = vshrl.u32 %v106, 7
    %v108 = vsub.s32 0, %v107
    %v109 = vrot.slane %v105, %v108
    %v110 = vmul.f32 %v103, %v109
    %111 = vrot.lane.b32.xlu0 %v57, 113
    %v112 = vpop.permute.xlu0 %111
    %v114 = vld [vmem:[%s1 + $0x6] sm:$0x1]
    %v115 = vlaneseq
    %v116 = vshrl.u32 %v115, 7
    %v117 = vsub.s32 0, %v116
    %v118 = vrot.slane %v114, %v117
    %v119 = vmul.f32 %v112, %v118
    %120 = vrot.lane.b32.xlu0 %v57, 112
    %v121 = vpop.permute.xlu0 %120
    %v123 = vld [vmem:[%s1 + $0x7] sm:$0x1]
    %v124 = vlaneseq
    %v125 = vshrl.u32 %v124, 7
    %v126 = vsub.s32 0, %v125
    %v127 = vrot.slane %v123, %v126
    %v128 = vmul.f32 %v121, %v127
    %129 = vrot.lane.b32.xlu0 %v57, 111
    %v130 = vpop.permute.xlu0 %129
    %v132 = vld [vmem:[%s1 + $0x8] sm:$0x1]
    %v133 = vlaneseq
    %v134 = vshrl.u32 %v133, 7
    %v135 = vsub.s32 0, %v134
    %v136 = vrot.slane %v132, %v135
    %v137 = vmul.f32 %v130, %v136
    %v139 = vrot.slane %v77, 6
    %v142 = vrot.slane %v86, 4
    %v145 = vrot.slane %v95, 2
    %v148 = vrot.slane %v110, 6
    %v151 = vrot.slane %v119, 4
    %v154 = vrot.slane %v128, 2
    %vm156 = vcmask 1041408
    %v157 = vsel %vm156, %v67, %v139
    %vm158 = vcmask 1043456
    %v159 = vsel %vm158, %v157, %v142
    %vm160 = vcmask 1045504
    %v161 = vsel %vm160, %v159, %v145
    %v162 = vsel %vm156, %v101, %v148
    %v163 = vsel %vm158, %v162, %v151
    %v164 = vsel %vm160, %v163, %v154
    %v165 = vld [vmem:[%s2] sm:$0xff]
    %v166 = vld [vmem:[%s2 + $0x8] sm:$0xff]
    %vm167 = vcmask 146432
    %v169 = vsel %vm167, %v165, 0
    %v172 = vsel %vm167, %v166, 0
    %v175 = vsel %vm156, %v137, 0
    %177 = vmatprep.subr.mxu0 0.0
    %178 = vmatpush1.msra.mxu0 %v161
    %179 = vmatprep.subr.mxu0 0.0
    %180 = vmatpush1.msra.mxu0 %v164
    %181 = vmatprep.subr.mxu0 0.0
    %182 = vmatpush1.msra.mxu0 %v175
    %183 = vmatprep.subr.mxu0 0.0
    %184 = vmatpush1.msra.mxu0 0.0
    %185 = vmatprep.subr.mxu0 0.0
    %186 = vmatpush1.msra.mxu0 0.0
    %187 = vmatprep.subr.mxu0 0.0
    %188 = vmatpush1.msra.mxu0 0.0
    %189 = vmatprep.subr.mxu0 0.0
    %190 = vmatpush1.msra.mxu0 0.0
    %191 = vmatprep.subr.mxu0 0.0
    %192 = vmatpush1.msra.mxu0 0.0
    %193 = vmatprep.subr.mxu0 0.0
    %194 = vmatpush1.msra.mxu0 0.0
    %195 = vmatprep.subr.mxu0 0.0
    %196 = vmatpush1.msra.mxu0 0.0
    %197 = vmatprep.subr.mxu0 0.0
    %198 = vmatpush1.msra.mxu0 0.0
    %199 = vmatprep.subr.mxu0 0.0
    %200 = vmatpush1.msra.mxu0 0.0
    %201 = vmatprep.subr.mxu0 0.0
    %202 = vmatpush1.msra.mxu0 0.0
    %203 = vmatprep.subr.mxu0 0.0
    %204 = vmatpush1.msra.mxu0 0.0
    %205 = vmatprep.subr.mxu0 0.0
    %206 = vmatpush1.msra.mxu0 0.0
    %207 = vmatprep.subr.mxu0 0.0
    %208 = vmatpush1.msra.mxu0 0.0
    %209 = vmatprep.subr.mxu0 0.0
    %210 = vmatpush1.msra.mxu0 0.0
    %211 = vmatprep.subr.mxu0 0.0
    %212 = vmatpush1.msra.mxu0 0.0
    %213 = vmatprep.subr.mxu0 0.0
    %214 = vmatpush1.msra.mxu0 0.0
    %215 = vmatprep.subr.mxu0 0.0
    %216 = vmatpush1.msra.mxu0 0.0
    %217 = vmatprep.subr.mxu0 0.0
    %218 = vmatpush1.msra.mxu0 0.0
    %219 = vmatprep.subr.mxu0 0.0
    %220 = vmatpush1.msra.mxu0 0.0
    %221 = vmatprep.subr.mxu0 0.0
    %222 = vmatpush1.msra.mxu0 0.0
    %223 = vmatprep.subr.mxu0 0.0
    %224 = vmatpush1.msra.mxu0 0.0
    %225 = vmatprep.subr.mxu0 0.0
    %226 = vmatpush1.msra.mxu0 0.0
    %227 = vmatprep.subr.mxu0 0.0
    %228 = vmatpush1.msra.mxu0 0.0
    %229 = vmatprep.subr.mxu0 0.0
    %230 = vmatpush1.msra.mxu0 0.0
    %231 = vmatprep.subr.mxu0 0.0
    %232 = vmatpush1.msra.mxu0 0.0
    %233 = vmatprep.subr.mxu0 0.0
    %234 = vmatpush1.msra.mxu0 0.0
    %235 = vmatprep.subr.mxu0 0.0
    %236 = vmatpush1.msra.mxu0 0.0
    %237 = vmatprep.subr.mxu0 0.0
    %238 = vmatpush1.msra.mxu0 0.0
    %239 = vmatprep.subr.mxu0 0.0
    %240 = vmatpush1.msra.mxu0 0.0
    %241 = vmatprep.mubr.f32.mxu0 0.0
    %242 = vmatmul.mubr.f32.gmra.mrb[0].mxu0 %v169
    %v243 = vpop.f32.mrb[0].mxu0
    %v244 = vadd.f32 0.0, %v243
    %v245 = vpop.f32.mrb[0].mxu0
    %246 = vmatprep.mubr.f32.mxu0 0.0
    %247 = vmatmul.mubr.f32.gmra.mrb[0].mxu0 %v172
    %v248 = vpop.f32.mrb[0].mxu0
    %v249 = vadd.f32 0.0, %v248
    %v250 = vpop.f32.mrb[0].mxu0
    %251 = vdwg.mxu0
    %v252 = vxor.u32 %v244, 2147483648
    %v253 = vxor.u32 %v249, 2147483648
    %v254 = vmul.f32 %v252, 1.442695
    %v255 = vpow.pop %v254
    %v256 = vmul.f32 %v253, 1.442695
    %v257 = vpow.pop %v256
    %v258 = vadd.f32 %v255, 1.0
    %v259 = vadd.f32 %v257, 1.0
    %v260 = vrcp.pop %v258
    %v261 = vmul.f32 1.0, %v260
    %v262 = vrcp.pop %v259
    %v263 = vmul.f32 1.0, %v262
    %v264 = vmul.f32 %v244, %v261
    %v265 = vmul.f32 %v249, %v263
    %268 = vrot.lane.b32.xlu0 %v264, 32
    %v269 = vpop.permute.xlu0 %268
    %270 = vrot.lane.b32.xlu0 %v265, 32
    %v271 = vpop.permute.xlu0 %270
    %v274 = vld [vmem:[%s1 + $0x9] sm:$0x1]
    %v275 = vlaneseq
    %v276 = vshrl.u32 %v275, 7
    %v277 = vsub.s32 0, %v276
    %v278 = vrot.slane %v274, %v277
    %v279 = vmul.f32 %v269, %v278
    %v280 = vmul.f32 %v271, %v278
    %v281 = vld [vmem:[%s3] sm:$0xff]
    %v282 = vld [vmem:[%s3 + $0x8] sm:$0xff]
    %284 = vset.pattern.permute.xlu0 0
    %285 = vperm.xlu0 %284, %v281
    %v286 = vpop.permute.xlu0 %285
    %289 = vset.pattern.permute.xlu0 0
    %290 = vperm.xlu0 %289, %v282
    %v291 = vpop.permute.xlu0 %290
    %v293 = vmul.f32 %v286, %v279
    %v294 = vmul.f32 %v291, %v280
    %v295 = vadd.f32 %v293, 0.0
    %v296 = vadd.f32 %v294, 0.0
    %297 = vrot.lane.b32.xlu0 %v264, 16
    %v298 = vpop.permute.xlu0 %297
    %299 = vrot.lane.b32.xlu0 %v265, 16
    %v300 = vpop.permute.xlu0 %299
    %v303 = vld [vmem:[%s1 + $0xa] sm:$0x1]
    %v304 = vlaneseq
    %v305 = vshrl.u32 %v304, 7
    %v306 = vsub.s32 0, %v305
    %v307 = vrot.slane %v303, %v306
    %v308 = vmul.f32 %v298, %v307
    %v309 = vmul.f32 %v300, %v307
    %310 = vset.pattern.permute.xlu0 1
    %311 = vperm.xlu0 %310, %v281
    %v312 = vpop.permute.xlu0 %311
    %314 = vset.pattern.permute.xlu0 1
    %315 = vperm.xlu0 %314, %v282
    %v316 = vpop.permute.xlu0 %315
    %v318 = vmul.f32 %v312, %v308
    %v319 = vmul.f32 %v316, %v309
    %v320 = vadd.f32 %v295, %v318
    %v321 = vadd.f32 %v296, %v319
    %v322 = vld [vmem:[%s1 + $0xb] sm:$0x1]
    %v323 = vlaneseq
    %v324 = vshrl.u32 %v323, 7
    %v325 = vsub.s32 0, %v324
    %v326 = vrot.slane %v322, %v325
    %v327 = vmul.f32 %v264, %v326
    %v328 = vmul.f32 %v265, %v326
    %329 = vset.pattern.permute.xlu0 2
    %330 = vperm.xlu0 %329, %v281
    %v331 = vpop.permute.xlu0 %330
    %333 = vset.pattern.permute.xlu0 2
    %334 = vperm.xlu0 %333, %v282
    %v335 = vpop.permute.xlu0 %334
    %v337 = vmul.f32 %v331, %v327
    %v338 = vmul.f32 %v335, %v328
    %v339 = vadd.f32 %v320, %v337
    %v340 = vadd.f32 %v321, %v338
    %341 = vrot.lane.b32.xlu0 %v264, 112
    %v342 = vpop.permute.xlu0 %341
    %343 = vrot.lane.b32.xlu0 %v265, 112
    %v344 = vpop.permute.xlu0 %343
    %v347 = vld [vmem:[%s1 + $0xc] sm:$0x1]
    %v348 = vlaneseq
    %v349 = vshrl.u32 %v348, 7
    %v350 = vsub.s32 0, %v349
    %v351 = vrot.slane %v347, %v350
    %v352 = vmul.f32 %v342, %v351
    %v353 = vmul.f32 %v344, %v351
    %354 = vset.pattern.permute.xlu0 3
    %355 = vperm.xlu0 %354, %v281
    %v356 = vpop.permute.xlu0 %355
    %358 = vset.pattern.permute.xlu0 3
    %359 = vperm.xlu0 %358, %v282
    %v360 = vpop.permute.xlu0 %359
    %v362 = vmul.f32 %v356, %v352
    %v363 = vmul.f32 %v360, %v353
    %v364 = vadd.f32 %v339, %v362
    %v365 = vadd.f32 %v340, %v363
    %366 = vrot.lane.b32.xlu0 %v264, 96
    %v367 = vpop.permute.xlu0 %366
    %368 = vrot.lane.b32.xlu0 %v265, 96
    %v369 = vpop.permute.xlu0 %368
    %v372 = vld [vmem:[%s1 + $0xd] sm:$0x1]
    %v373 = vlaneseq
    %v374 = vshrl.u32 %v373, 7
    %v375 = vsub.s32 0, %v374
    %v376 = vrot.slane %v372, %v375
    %v377 = vmul.f32 %v367, %v376
    %v378 = vmul.f32 %v369, %v376
    %379 = vset.pattern.permute.xlu0 4
    %380 = vperm.xlu0 %379, %v281
    %v381 = vpop.permute.xlu0 %380
    %383 = vset.pattern.permute.xlu0 4
    %384 = vperm.xlu0 %383, %v282
    %v385 = vpop.permute.xlu0 %384
    %v387 = vmul.f32 %v381, %v377
    %v388 = vmul.f32 %v385, %v378
    %v389 = vadd.f32 %v364, %v387
    %v390 = vadd.f32 %v365, %v388
    %v391 = vxor.u32 %v389, 2147483648
    %v392 = vxor.u32 %v390, 2147483648
    %v393 = vmul.f32 %v391, 1.442695
    %v394 = vpow.pop %v393
    %v395 = vmul.f32 %v392, 1.442695
    %v396 = vpow.pop %v395
    %v397 = vadd.f32 %v394, 1.0
    %v398 = vadd.f32 %v396, 1.0
    %v399 = vrcp.pop %v397
    %v400 = vmul.f32 1.0, %v399
    %v401 = vrcp.pop %v398
    %v402 = vmul.f32 1.0, %v401
    %v403 = vmul.f32 %v389, %v400
    %v404 = vmul.f32 %v390, %v402
    %v405 = vld [vmem:[%s4] sm:$0x3]
    %v407 = vsel %vm71, %v405, 0
    %409 = vmatprep.subr.mxu0 0.0
    %410 = vmatpush1.msra.mxu0 %v403
    %411 = vmatprep.subr.mxu0 0.0
    %412 = vmatpush1.msra.mxu0 %v404
    %413 = vmatprep.subr.mxu0 0.0
    %414 = vmatpush1.msra.mxu0 0.0
    %415 = vmatprep.subr.mxu0 0.0
    %416 = vmatpush1.msra.mxu0 0.0
    %417 = vmatprep.subr.mxu0 0.0
    %418 = vmatpush1.msra.mxu0 0.0
    %419 = vmatprep.subr.mxu0 0.0
    %420 = vmatpush1.msra.mxu0 0.0
    %421 = vmatprep.subr.mxu0 0.0
    %422 = vmatpush1.msra.mxu0 0.0
    %423 = vmatprep.subr.mxu0 0.0
    %424 = vmatpush1.msra.mxu0 0.0
    %425 = vmatprep.subr.mxu0 0.0
    %426 = vmatpush1.msra.mxu0 0.0
    %427 = vmatprep.subr.mxu0 0.0
    %428 = vmatpush1.msra.mxu0 0.0
    %429 = vmatprep.subr.mxu0 0.0
    %430 = vmatpush1.msra.mxu0 0.0
    %431 = vmatprep.subr.mxu0 0.0
    %432 = vmatpush1.msra.mxu0 0.0
    %433 = vmatprep.subr.mxu0 0.0
    %434 = vmatpush1.msra.mxu0 0.0
    %435 = vmatprep.subr.mxu0 0.0
    %436 = vmatpush1.msra.mxu0 0.0
    %437 = vmatprep.subr.mxu0 0.0
    %438 = vmatpush1.msra.mxu0 0.0
    %439 = vmatprep.subr.mxu0 0.0
    %440 = vmatpush1.msra.mxu0 0.0
    %441 = vmatprep.subr.mxu0 0.0
    %442 = vmatpush1.msra.mxu0 0.0
    %443 = vmatprep.subr.mxu0 0.0
    %444 = vmatpush1.msra.mxu0 0.0
    %445 = vmatprep.subr.mxu0 0.0
    %446 = vmatpush1.msra.mxu0 0.0
    %447 = vmatprep.subr.mxu0 0.0
    %448 = vmatpush1.msra.mxu0 0.0
    %449 = vmatprep.subr.mxu0 0.0
    %450 = vmatpush1.msra.mxu0 0.0
    %451 = vmatprep.subr.mxu0 0.0
    %452 = vmatpush1.msra.mxu0 0.0
    %453 = vmatprep.subr.mxu0 0.0
    %454 = vmatpush1.msra.mxu0 0.0
    %455 = vmatprep.subr.mxu0 0.0
    %456 = vmatpush1.msra.mxu0 0.0
    %457 = vmatprep.subr.mxu0 0.0
    %458 = vmatpush1.msra.mxu0 0.0
    %459 = vmatprep.subr.mxu0 0.0
    %460 = vmatpush1.msra.mxu0 0.0
    %461 = vmatprep.subr.mxu0 0.0
    %462 = vmatpush1.msra.mxu0 0.0
    %463 = vmatprep.subr.mxu0 0.0
    %464 = vmatpush1.msra.mxu0 0.0
    %465 = vmatprep.subr.mxu0 0.0
    %466 = vmatpush1.msra.mxu0 0.0
    %467 = vmatprep.subr.mxu0 0.0
    %468 = vmatpush1.msra.mxu0 0.0
    %469 = vmatprep.subr.mxu0 0.0
    %470 = vmatpush1.msra.mxu0 0.0
    %471 = vmatprep.subr.mxu0 0.0
    %472 = vmatpush1.msra.mxu0 0.0
    %473 = vmatprep.mubr.f32.mxu0 0.0
    %474 = vmatmul.mubr.f32.gmra.mrb[0].mxu0 %v407
    %v475 = vpop.f32.mrb[0].mxu0
    %v476 = vadd.f32 0.0, %v475
    %v477 = vpop.f32.mrb[0].mxu0
    %478 = vdwg.mxu0
    %v479 = vmul.f32 %v476, 1.3416324
    %v480 = vadd.f32 %v479, -0.16708162
    %v481 = vxor.u32 %v480, 2147483648
    %v482 = vmul.f32 %v481, 1.442695
    %v483 = vpow.pop %v482
    %v484 = vadd.f32 %v483, 1.0
    %v485 = vrcp.pop %v484
    %v486 = vmul.f32 1.0, %v485
    %v487 = vmul.f32 %v480, %v486
    %v488 = vld [vmem:[%s1 + $0xe] sm:$0x1]
    %490 = vrot.lane.b32.xlu0 %v487, 1
    %v491 = vpop.permute.xlu0 %490
    %v493 = vlaneseq
    %v494 = vshrl.u32 %v493, 7
    %v495 = vsub.s32 0, %v494
    %v496 = vrot.slane %v488, %v495
    %v497 = vmul.f32 %v496, %v491
    %v498 = vadd.f32 %v497, 0.0
    %v499 = vld [vmem:[%s1 + $0xf] sm:$0x1]
    %v500 = vlaneseq
    %v501 = vshrl.u32 %v500, 7
    %v502 = vsub.s32 0, %v501
    %v503 = vrot.slane %v499, %v502
    %v504 = vmul.f32 %v503, %v487
    %v505 = vadd.f32 %v498, %v504
    %v506 = vld [vmem:[%s1 + $0x10] sm:$0x1]
    %507 = vrot.lane.b32.xlu0 %v487, 127
    %v508 = vpop.permute.xlu0 %507
    %v510 = vlaneseq
    %v511 = vshrl.u32 %v510, 7
    %v512 = vsub.s32 0, %v511
    %v513 = vrot.slane %v506, %v512
    %v514 = vmul.f32 %v513, %v508
    %v515 = vadd.f32 %v505, %v514
    %v516 = vld [vmem:[#allocation2] sm:$0xff]
    %v517 = vld [vmem:[#allocation2 + $0x28] sm:$0xff]
    %v518 = vld [vmem:[#allocation2 + $0x50] sm:$0xff]
    %v519 = vld [vmem:[#allocation2 + $0x78] sm:$0xff]
    %v520 = vld [vmem:[#allocation2 + $0xa0] sm:$0xff]
    %v521 = vld [vmem:[#allocation2 + $0xc8] sm:$0xff]
    %v522 = vld [vmem:[#allocation2 + $0xf0] sm:$0xff]
    %v523 = vld [vmem:[#allocation2 + $0x118] sm:$0xff]
    %v524 = vld [vmem:[#allocation2 + $0x140] sm:$0xff]
    %v525 = vld [vmem:[#allocation2 + $0x168] sm:$0xff]
    %v526 = vld [vmem:[#allocation2 + $0x190] sm:$0xff]
    %v527 = vld [vmem:[#allocation2 + $0x1b8] sm:$0xff]
    %v528 = vld [vmem:[#allocation2 + $0x1e0] sm:$0xff]
    %v529 = vld [vmem:[#allocation2 + $0x208] sm:$0xff]
    %v530 = vld [vmem:[#allocation2 + $0x230] sm:$0xff]
    %v531 = vld [vmem:[#allocation2 + $0x258] sm:$0xff]
    %532 = vmatprep.subr.mxu0 0.0
    %533 = vmatpush1.msra.mxu0 %v516
    %534 = vmatprep.subr.mxu0 0.0
    %535 = vmatpush1.msra.mxu0 %v517
    %536 = vmatprep.subr.mxu0 0.0
    %537 = vmatpush1.msra.mxu0 %v518
    %538 = vmatprep.subr.mxu0 0.0
    %539 = vmatpush1.msra.mxu0 %v519
    %540 = vmatprep.subr.mxu0 0.0
    %541 = vmatpush1.msra.mxu0 %v520
    %542 = vmatprep.subr.mxu0 0.0
    %543 = vmatpush1.msra.mxu0 %v521
    %544 = vmatprep.subr.mxu0 0.0
    %545 = vmatpush1.msra.mxu0 %v522
    %546 = vmatprep.subr.mxu0 0.0
    %547 = vmatpush1.msra.mxu0 %v523
    %548 = vmatprep.subr.mxu0 0.0
    %549 = vmatpush1.msra.mxu0 %v524
    %550 = vmatprep.subr.mxu0 0.0
    %551 = vmatpush1.msra.mxu0 %v525
    %552 = vmatprep.subr.mxu0 0.0
    %553 = vmatpush1.msra.mxu0 %v526
    %554 = vmatprep.subr.mxu0 0.0
    %555 = vmatpush1.msra.mxu0 %v527
    %556 = vmatprep.subr.mxu0 0.0
    %557 = vmatpush1.msra.mxu0 %v528
    %558 = vmatprep.subr.mxu0 0.0
    %559 = vmatpush1.msra.mxu0 %v529
    %560 = vmatprep.subr.mxu0 0.0
    %561 = vmatpush1.msra.mxu0 %v530
    %562 = vmatprep.subr.mxu0 0.0
    %563 = vmatpush1.msra.mxu0 %v531
    %564 = vmatprep.subr.mxu0 0.0
    %565 = vmatpush1.msra.mxu0 0.0
    %566 = vmatprep.subr.mxu0 0.0
    %567 = vmatpush1.msra.mxu0 0.0
    %568 = vmatprep.subr.mxu0 0.0
    %569 = vmatpush1.msra.mxu0 0.0
    %570 = vmatprep.subr.mxu0 0.0
    %571 = vmatpush1.msra.mxu0 0.0
    %572 = vmatprep.subr.mxu0 0.0
    %573 = vmatpush1.msra.mxu0 0.0
    %574 = vmatprep.subr.mxu0 0.0
    %575 = vmatpush1.msra.mxu0 0.0
    %576 = vmatprep.subr.mxu0 0.0
    %577 = vmatpush1.msra.mxu0 0.0
    %578 = vmatprep.subr.mxu0 0.0
    %579 = vmatpush1.msra.mxu0 0.0
    %580 = vmatprep.subr.mxu0 0.0
    %581 = vmatpush1.msra.mxu0 0.0
    %582 = vmatprep.subr.mxu0 0.0
    %583 = vmatpush1.msra.mxu0 0.0
    %584 = vmatprep.subr.mxu0 0.0
    %585 = vmatpush1.msra.mxu0 0.0
    %586 = vmatprep.subr.mxu0 0.0
    %587 = vmatpush1.msra.mxu0 0.0
    %588 = vmatprep.subr.mxu0 0.0
    %589 = vmatpush1.msra.mxu0 0.0
    %590 = vmatprep.subr.mxu0 0.0
    %591 = vmatpush1.msra.mxu0 0.0
    %592 = vmatprep.subr.mxu0 0.0
    %593 = vmatpush1.msra.mxu0 0.0
    %594 = vmatprep.subr.mxu0 0.0
    %595 = vmatpush1.msra.mxu0 0.0
    %596 = vmatprep.mubr.f32.mxu0 0.0
    %597 = vmatmul.mubr.f32.gmra.mrb[0].mxu0 %v515
    %v598 = vpop.f32.mrb[0].mxu0
    %v599 = vadd.f32 0.0, %v598
    %v600 = vpop.f32.mrb[0].mxu0
    %601 = vdwg.mxu0
    %v602 = vld [vmem:[%s5] sm:$0x1]
    %v603 = vlaneseq
    %v604 = vshrl.u32 %v603, 7
    %v605 = vsub.s32 0, %v604
    %v606 = vrot.slane %v602, %v605
    %v607 = vmul.f32 %v599, %v606
    %v608 = vld [vmem:[%s5 + $0x1] sm:$0x1]
    %v609 = vlaneseq
    %v610 = vshrl.u32 %v609, 7
    %v611 = vsub.s32 0, %v610
    %v612 = vrot.slane %v608, %v611
    %v613 = vadd.f32 %v607, %v612
    %v614 = vxor.u32 %v613, 2147483648
    %v615 = vmul.f32 %v614, 1.442695
    %v616 = vpow.pop %v615
    %v617 = vadd.f32 %v616, 1.0
    %v618 = vrcp.pop %v617
    %v619 = vmul.f32 1.0, %v618
    %v620 = vmul.f32 %v613, %v619
    %v621 = vld [vmem:[#allocation2 + $0x8] sm:$0xff]
    %v622 = vld [vmem:[#allocation2 + $0x30] sm:$0xff]
    %v623 = vld [vmem:[#allocation2 + $0x58] sm:$0xff]
    %v624 = vld [vmem:[#allocation2 + $0x80] sm:$0xff]
    %v625 = vld [vmem:[#allocation2 + $0xa8] sm:$0xff]
    %v626 = vld [vmem:[#allocation2 + $0xd0] sm:$0xff]
    %v627 = vld [vmem:[#allocation2 + $0xf8] sm:$0xff]
    %v628 = vld [vmem:[#allocation2 + $0x120] sm:$0xff]
    %v629 = vld [vmem:[#allocation2 + $0x148] sm:$0xff]
    %v630 = vld [vmem:[#allocation2 + $0x170] sm:$0xff]
    %v631 = vld [vmem:[#allocation2 + $0x198] sm:$0xff]
    %v632 = vld [vmem:[#allocation2 + $0x1c0] sm:$0xff]
    %v633 = vld [vmem:[#allocation2 + $0x1e8] sm:$0xff]
    %v634 = vld [vmem:[#allocation2 + $0x210] sm:$0xff]
    %v635 = vld [vmem:[#allocation2 + $0x238] sm:$0xff]
    %v636 = vld [vmem:[#allocation2 + $0x260] sm:$0xff]
    %637 = vmatprep.subr.mxu0 0.0
    %638 = vmatpush1.msra.mxu0 %v621
    %639 = vmatprep.subr.mxu0 0.0
    %640 = vmatpush1.msra.mxu0 %v622
    %641 = vmatprep.subr.mxu0 0.0
    %642 = vmatpush1.msra.mxu0 %v623
    %643 = vmatprep.subr.mxu0 0.0
    %644 = vmatpush1.msra.mxu0 %v624
    %645 = vmatprep.subr.mxu0 0.0
    %646 = vmatpush1.msra.mxu0 %v625
    %647 = vmatprep.subr.mxu0 0.0
    %648 = vmatpush1.msra.mxu0 %v626
    %649 = vmatprep.subr.mxu0 0.0
    %650 = vmatpush1.msra.mxu0 %v627
    %651 = vmatprep.subr.mxu0 0.0
    %652 = vmatpush1.msra.mxu0 %v628
    %653 = vmatprep.subr.mxu0 0.0
    %654 = vmatpush1.msra.mxu0 %v629
    %655 = vmatprep.subr.mxu0 0.0
    %656 = vmatpush1.msra.mxu0 %v630
    %657 = vmatprep.subr.mxu0 0.0
    %658 = vmatpush1.msra.mxu0 %v631
    %659 = vmatprep.subr.mxu0 0.0
    %660 = vmatpush1.msra.mxu0 %v632
    %661 = vmatprep.subr.mxu0 0.0
    %662 = vmatpush1.msra.mxu0 %v633
    %663 = vmatprep.subr.mxu0 0.0
    %664 = vmatpush1.msra.mxu0 %v634
    %665 = vmatprep.subr.mxu0 0.0
    %666 = vmatpush1.msra.mxu0 %v635
    %667 = vmatprep.subr.mxu0 0.0
    %668 = vmatpush1.msra.mxu0 %v636
    %669 = vmatprep.subr.mxu0 0.0
    %670 = vmatpush1.msra.mxu0 0.0
    %671 = vmatprep.subr.mxu0 0.0
    %672 = vmatpush1.msra.mxu0 0.0
    %673 = vmatprep.subr.mxu0 0.0
    %674 = vmatpush1.msra.mxu0 0.0
    %675 = vmatprep.subr.mxu0 0.0
    %676 = vmatpush1.msra.mxu0 0.0
    %677 = vmatprep.subr.mxu0 0.0
    %678 = vmatpush1.msra.mxu0 0.0
    %679 = vmatprep.subr.mxu0 0.0
    %680 = vmatpush1.msra.mxu0 0.0
    %681 = vmatprep.subr.mxu0 0.0
    %682 = vmatpush1.msra.mxu0 0.0
    %683 = vmatprep.subr.mxu0 0.0
    %684 = vmatpush1.msra.mxu0 0.0
    %685 = vmatprep.subr.mxu0 0.0
    %686 = vmatpush1.msra.mxu0 0.0
    %687 = vmatprep.subr.mxu0 0.0
    %688 = vmatpush1.msra.mxu0 0.0
    %689 = vmatprep.subr.mxu0 0.0
    %690 = vmatpush1.msra.mxu0 0.0
    %691 = vmatprep.subr.mxu0 0.0
    %692 = vmatpush1.msra.mxu0 0.0
    %693 = vmatprep.subr.mxu0 0.0
    %694 = vmatpush1.msra.mxu0 0.0
    %695 = vmatprep.subr.mxu0 0.0
    %696 = vmatpush1.msra.mxu0 0.0
    %697 = vmatprep.subr.mxu0 0.0
    %698 = vmatpush1.msra.mxu0 0.0
    %699 = vmatprep.subr.mxu0 0.0
    %700 = vmatpush1.msra.mxu0 0.0
    %701 = vmatprep.mubr.f32.mxu0 0.0
    %702 = vmatmul.mubr.f32.gmra.mrb[0].mxu0 %v620
    %v703 = vpop.f32.mrb[0].mxu0
    %v704 = vadd.f32 0.0, %v703
    %v705 = vpop.f32.mrb[0].mxu0
    %706 = vdwg.mxu0
    %v707 = vsub.f32 %v620, %v704
    %v708 = vmul.f32 %v707, %v707
    %709 = vmatprep.subr.mxu0 0.0
    %710 = vmatpush1.msra.mxu0 %v621
    %711 = vmatprep.subr.mxu0 0.0
    %712 = vmatpush1.msra.mxu0 %v622
    %713 = vmatprep.subr.mxu0 0.0
    %714 = vmatpush1.msra.mxu0 %v623
    %715 = vmatprep.subr.mxu0 0.0
    %716 = vmatpush1.msra.mxu0 %v624
    %717 = vmatprep.subr.mxu0 0.0
    %718 = vmatpush1.msra.mxu0 %v625
    %719 = vmatprep.subr.mxu0 0.0
    %720 = vmatpush1.msra.mxu0 %v626
    %721 = vmatprep.subr.mxu0 0.0
    %722 = vmatpush1.msra.mxu0 %v627
    %723 = vmatprep.subr.mxu0 0.0
    %724 = vmatpush1.msra.mxu0 %v628
    %725 = vmatprep.subr.mxu0 0.0
    %726 = vmatpush1.msra.mxu0 %v629
    %727 = vmatprep.subr.mxu0 0.0
    %728 = vmatpush1.msra.mxu0 %v630
    %729 = vmatprep.subr.mxu0 0.0
    %730 = vmatpush1.msra.mxu0 %v631
    %731 = vmatprep.subr.mxu0 0.0
    %732 = vmatpush1.msra.mxu0 %v632
    %733 = vmatprep.subr.mxu0 0.0
    %734 = vmatpush1.msra.mxu0 %v633
    %735 = vmatprep.subr.mxu0 0.0
    %736 = vmatpush1.msra.mxu0 %v634
    %737 = vmatprep.subr.mxu0 0.0
    %738 = vmatpush1.msra.mxu0 %v635
    %739 = vmatprep.subr.mxu0 0.0
    %740 = vmatpush1.msra.mxu0 %v636
    %741 = vmatprep.subr.mxu0 0.0
    %742 = vmatpush1.msra.mxu0 0.0
    %743 = vmatprep.subr.mxu0 0.0
    %744 = vmatpush1.msra.mxu0 0.0
    %745 = vmatprep.subr.mxu0 0.0
    %746 = vmatpush1.msra.mxu0 0.0
    %747 = vmatprep.subr.mxu0 0.0
    %748 = vmatpush1.msra.mxu0 0.0
    %749 = vmatprep.subr.mxu0 0.0
    %750 = vmatpush1.msra.mxu0 0.0
    %751 = vmatprep.subr.mxu0 0.0
    %752 = vmatpush1.msra.mxu0 0.0
    %753 = vmatprep.subr.mxu0 0.0
    %754 = vmatpush1.msra.mxu0 0.0
    %755 = vmatprep.subr.mxu0 0.0
    %756 = vmatpush1.msra.mxu0 0.0
    %757 = vmatprep.subr.mxu0 0.0
    %758 = vmatpush1.msra.mxu0 0.0
    %759 = vmatprep.subr.mxu0 0.0
    %760 = vmatpush1.msra.mxu0 0.0
    %761 = vmatprep.subr.mxu0 0.0
    %762 = vmatpush1.msra.mxu0 0.0
    %763 = vmatprep.subr.mxu0 0.0
    %764 = vmatpush1.msra.mxu0 0.0
    %765 = vmatprep.subr.mxu0 0.0
    %766 = vmatpush1.msra.mxu0 0.0
    %767 = vmatprep.subr.mxu0 0.0
    %768 = vmatpush1.msra.mxu0 0.0
    %769 = vmatprep.subr.mxu0 0.0
    %770 = vmatpush1.msra.mxu0 0.0
    %771 = vmatprep.subr.mxu0 0.0
    %772 = vmatpush1.msra.mxu0 0.0
    %773 = vmatprep.mubr.f32.mxu0 0.0
    %774 = vmatmul.mubr.f32.gmra.mrb[0].mxu0 %v708
    %v775 = vpop.f32.mrb[0].mxu0
    %v776 = vadd.f32 1e-05, %v775
    %v777 = vpop.f32.mrb[0].mxu0
    %778 = vdwg.mxu0
    %v779 = vrsqrt.pop %v776
    %v780 = vmul.f32 %v707, %v779
    %v781 = vld [vmem:[%s5 + $0x2] sm:$0x1]
    %v782 = vlaneseq
    %v783 = vshrl.u32 %v782, 7
    %v784 = vsub.s32 0, %v783
    %v785 = vrot.slane %v781, %v784
    %v786 = vmul.f32 %v780, %v785
    %v787 = vld [vmem:[%s5 + $0x3] sm:$0x1]
    %v788 = vlaneseq
    %v789 = vshrl.u32 %v788, 7
    %v790 = vsub.s32 0, %v789
    %v791 = vrot.slane %v787, %v790
    %v792 = vadd.f32 %v786, %v791
    %v793 = vld [vmem:[#allocation2 + $0x18] sm:$0xff]
    %v794 = vld [vmem:[#allocation2 + $0x40] sm:$0xff]
    %v795 = vld [vmem:[#allocation2 + $0x68] sm:$0xff]
    %v796 = vld [vmem:[#allocation2 + $0x90] sm:$0xff]
    %v797 = vld [vmem:[#allocation2 + $0xb8] sm:$0xff]
    %v798 = vld [vmem:[#allocation2 + $0xe0] sm:$0xff]
    %v799 = vld [vmem:[#allocation2 + $0x108] sm:$0xff]
    %v800 = vld [vmem:[#allocation2 + $0x130] sm:$0xff]
    %v801 = vld [vmem:[#allocation2 + $0x158] sm:$0xff]
    %v802 = vld [vmem:[#allocation2 + $0x180] sm:$0xff]
    %v803 = vld [vmem:[#allocation2 + $0x1a8] sm:$0xff]
    %v804 = vld [vmem:[#allocation2 + $0x1d0] sm:$0xff]
    %v805 = vld [vmem:[#allocation2 + $0x1f8] sm:$0xff]
    %v806 = vld [vmem:[#allocation2 + $0x220] sm:$0xff]
    %v807 = vld [vmem:[#allocation2 + $0x248] sm:$0xff]
    %v808 = vld [vmem:[#allocation2 + $0x270] sm:$0xff]
    %v809 = vld [vmem:[%s5 + $0x4] sm:$0x1]
    %v810 = vlaneseq
    %v811 = vshrl.u32 %v810, 7
    %v812 = vsub.s32 0, %v811
    %v813 = vrot.slane %v809, %v812
    %814 = vmatprep.subr.mxu0 0.0
    %815 = vmatpush1.msra.mxu0 %v793
    %816 = vmatprep.subr.mxu0 0.0
    %817 = vmatpush1.msra.mxu0 %v794
    %818 = vmatprep.subr.mxu0 0.0
    %819 = vmatpush1.msra.mxu0 %v795
    %820 = vmatprep.subr.mxu0 0.0
    %821 = vmatpush1.msra.mxu0 %v796
    %822 = vmatprep.subr.mxu0 0.0
    %823 = vmatpush1.msra.mxu0 %v797
    %824 = vmatprep.subr.mxu0 0.0
    %825 = vmatpush1.msra.mxu0 %v798
    %826 = vmatprep.subr.mxu0 0.0
    %827 = vmatpush1.msra.mxu0 %v799
    %828 = vmatprep.subr.mxu0 0.0
    %829 = vmatpush1.msra.mxu0 %v800
    %830 = vmatprep.subr.mxu0 0.0
    %831 = vmatpush1.msra.mxu0 %v801
    %832 = vmatprep.subr.mxu0 0.0
    %833 = vmatpush1.msra.mxu0 %v802
    %834 = vmatprep.subr.mxu0 0.0
    %835 = vmatpush1.msra.mxu0 %v803
    %836 = vmatprep.subr.mxu0 0.0
    %837 = vmatpush1.msra.mxu0 %v804
    %838 = vmatprep.subr.mxu0 0.0
    %839 = vmatpush1.msra.mxu0 %v805
    %840 = vmatprep.subr.mxu0 0.0
    %841 = vmatpush1.msra.mxu0 %v806
    %842 = vmatprep.subr.mxu0 0.0
    %843 = vmatpush1.msra.mxu0 %v807
    %844 = vmatprep.subr.mxu0 0.0
    %845 = vmatpush1.msra.mxu0 %v808
    %846 = vmatprep.subr.mxu0 0.0
    %847 = vmatpush1.msra.mxu0 0.0
    %848 = vmatprep.subr.mxu0 0.0
    %849 = vmatpush1.msra.mxu0 0.0
    %850 = vmatprep.subr.mxu0 0.0
    %851 = vmatpush1.msra.mxu0 0.0
    %852 = vmatprep.subr.mxu0 0.0
    %853 = vmatpush1.msra.mxu0 0.0
    %854 = vmatprep.subr.mxu0 0.0
    %855 = vmatpush1.msra.mxu0 0.0
    %856 = vmatprep.subr.mxu0 0.0
    %857 = vmatpush1.msra.mxu0 0.0
    %858 = vmatprep.subr.mxu0 0.0
    %859 = vmatpush1.msra.mxu0 0.0
    %860 = vmatprep.subr.mxu0 0.0
    %861 = vmatpush1.msra.mxu0 0.0
    %862 = vmatprep.subr.mxu0 0.0
    %863 = vmatpush1.msra.mxu0 0.0
    %864 = vmatprep.subr.mxu0 0.0
    %865 = vmatpush1.msra.mxu0 0.0
    %866 = vmatprep.subr.mxu0 0.0
    %867 = vmatpush1.msra.mxu0 0.0
    %868 = vmatprep.subr.mxu0 0.0
    %869 = vmatpush1.msra.mxu0 0.0
    %870 = vmatprep.subr.mxu0 0.0
    %871 = vmatpush1.msra.mxu0 0.0
    %872 = vmatprep.subr.mxu0 0.0
    %873 = vmatpush1.msra.mxu0 0.0
    %874 = vmatprep.subr.mxu0 0.0
    %875 = vmatpush1.msra.mxu0 0.0
    %876 = vmatprep.subr.mxu0 0.0
    %877 = vmatpush1.msra.mxu0 0.0
    %878 = vmatprep.mubr.f32.mxu0 0.0
    %879 = vmatmul.mubr.f32.gmra.mrb[0].mxu0 %v792
    %v880 = vpop.f32.mrb[0].mxu0
    %v881 = vadd.f32 %v813, %v880
    %v882 = vpop.f32.mrb[0].mxu0
    %883 = vdwg.mxu0
    %v884 = vmul.f32 %v881, 0.5
    %v885 = vmul.f32 %v881, 0.70710677
    %v886 = verf.f32.pop %v885
    %v887 = vadd.f32 %v886, 1.0
    %v888 = vmul.f32 %v884, %v887
    %v889 = vld [vmem:[#allocation4] sm:$0xff]
    %v890 = vld [vmem:[#allocation4 + $0x8] sm:$0xff]
    %v891 = vld [vmem:[#allocation4 + $0x10] sm:$0xff]
    %v892 = vld [vmem:[#allocation4 + $0x18] sm:$0xff]
    %v893 = vld [vmem:[#allocation4 + $0x20] sm:$0xff]
    %v894 = vld [vmem:[#allocation4 + $0x28] sm:$0xff]
    %v895 = vld [vmem:[#allocation4 + $0x30] sm:$0xff]
    %v896 = vld [vmem:[#allocation4 + $0x38] sm:$0xff]
    %v897 = vld [vmem:[#allocation4 + $0x40] sm:$0xff]
    %v898 = vld [vmem:[#allocation4 + $0x48] sm:$0xff]
    %v899 = vld [vmem:[#allocation4 + $0x50] sm:$0xff]
    %v900 = vld [vmem:[#allocation4 + $0x58] sm:$0xff]
    %v901 = vld [vmem:[#allocation4 + $0x60] sm:$0xff]
    %v902 = vld [vmem:[#allocation4 + $0x68] sm:$0xff]
    %v903 = vld [vmem:[#allocation4 + $0x70] sm:$0xff]
    %v904 = vld [vmem:[#allocation4 + $0x78] sm:$0xff]
    %v905 = vld [vmem:[%s5 + $0x5] sm:$0x1]
    %v906 = vlaneseq
    %v907 = vshrl.u32 %v906, 7
    %v908 = vsub.s32 0, %v907
    %v909 = vrot.slane %v905, %v908
    %910 = vmatprep.subr.mxu0 0.0
    %911 = vmatpush1.msra.mxu0 %v889
    %912 = vmatprep.subr.mxu0 0.0
    %913 = vmatpush1.msra.mxu0 %v890
    %914 = vmatprep.subr.mxu0 0.0
    %915 = vmatpush1.msra.mxu0 %v891
    %916 = vmatprep.subr.mxu0 0.0
    %917 = vmatpush1.msra.mxu0 %v892
    %918 = vmatprep.subr.mxu0 0.0
    %919 = vmatpush1.msra.mxu0 %v893
    %920 = vmatprep.subr.mxu0 0.0
    %921 = vmatpush1.msra.mxu0 %v894
    %922 = vmatprep.subr.mxu0 0.0
    %923 = vmatpush1.msra.mxu0 %v895
    %924 = vmatprep.subr.mxu0 0.0
    %925 = vmatpush1.msra.mxu0 %v896
    %926 = vmatprep.subr.mxu0 0.0
    %927 = vmatpush1.msra.mxu0 %v897
    %928 = vmatprep.subr.mxu0 0.0
    %929 = vmatpush1.msra.mxu0 %v898
    %930 = vmatprep.subr.mxu0 0.0
    %931 = vmatpush1.msra.mxu0 %v899
    %932 = vmatprep.subr.mxu0 0.0
    %933 = vmatpush1.msra.mxu0 %v900
    %934 = vmatprep.subr.mxu0 0.0
    %935 = vmatpush1.msra.mxu0 %v901
    %936 = vmatprep.subr.mxu0 0.0
    %937 = vmatpush1.msra.mxu0 %v902
    %938 = vmatprep.subr.mxu0 0.0
    %939 = vmatpush1.msra.mxu0 %v903
    %940 = vmatprep.subr.mxu0 0.0
    %941 = vmatpush1.msra.mxu0 %v904
    %942 = vmatprep.subr.mxu0 0.0
    %943 = vmatpush1.msra.mxu0 0.0
    %944 = vmatprep.subr.mxu0 0.0
    %945 = vmatpush1.msra.mxu0 0.0
    %946 = vmatprep.subr.mxu0 0.0
    %947 = vmatpush1.msra.mxu0 0.0
    %948 = vmatprep.subr.mxu0 0.0
    %949 = vmatpush1.msra.mxu0 0.0
    %950 = vmatprep.subr.mxu0 0.0
    %951 = vmatpush1.msra.mxu0 0.0
    %952 = vmatprep.subr.mxu0 0.0
    %953 = vmatpush1.msra.mxu0 0.0
    %954 = vmatprep.subr.mxu0 0.0
    %955 = vmatpush1.msra.mxu0 0.0
    %956 = vmatprep.subr.mxu0 0.0
    %957 = vmatpush1.msra.mxu0 0.0
    %958 = vmatprep.subr.mxu0 0.0
    %959 = vmatpush1.msra.mxu0 0.0
    %960 = vmatprep.subr.mxu0 0.0
    %961 = vmatpush1.msra.mxu0 0.0
    %962 = vmatprep.subr.mxu0 0.0
    %963 = vmatpush1.msra.mxu0 0.0
    %964 = vmatprep.subr.mxu0 0.0
    %965 = vmatpush1.msra.mxu0 0.0
    %966 = vmatprep.subr.mxu0 0.0
    %967 = vmatpush1.msra.mxu0 0.0
    %968 = vmatprep.subr.mxu0 0.0
    %969 = vmatpush1.msra.mxu0 0.0
    %970 = vmatprep.subr.mxu0 0.0
    %971 = vmatpush1.msra.mxu0 0.0
    %972 = vmatprep.subr.mxu0 0.0
    %973 = vmatpush1.msra.mxu0 0.0
    %974 = vmatprep.mubr.f32.mxu0 0.0
    %975 = vmatmul.mubr.f32.gmra.mrb[0].mxu0 %v888
    %v976 = vpop.f32.mrb[0].mxu0
    %v977 = vadd.f32 %v909, %v976
    %v978 = vpop.f32.mrb[0].mxu0
    %979 = vdwg.mxu0
    %v980 = vadd.f32 %v620, %v977
    %v981 = vld [vmem:[#allocation2 + $0x10] sm:$0xff]
    %v982 = vld [vmem:[#allocation2 + $0x38] sm:$0xff]
    %v983 = vld [vmem:[#allocation2 + $0x60] sm:$0xff]
    %v984 = vld [vmem:[#allocation2 + $0x88] sm:$0xff]
    %v985 = vld [vmem:[#allocation2 + $0xb0] sm:$0xff]
    %v986 = vld [vmem:[#allocation2 + $0xd8] sm:$0xff]
    %v987 = vld [vmem:[#allocation2 + $0x100] sm:$0xff]
    %v988 = vld [vmem:[#allocation2 + $0x128] sm:$0xff]
    %v989 = vld [vmem:[#allocation2 + $0x150] sm:$0xff]
    %v990 = vld [vmem:[#allocation2 + $0x178] sm:$0xff]
    %v991 = vld [vmem:[#allocation2 + $0x1a0] sm:$0xff]
    %v992 = vld [vmem:[#allocation2 + $0x1c8] sm:$0xff]
    %v993 = vld [vmem:[#allocation2 + $0x1f0] sm:$0xff]
    %v994 = vld [vmem:[#allocation2 + $0x218] sm:$0xff]
    %v995 = vld [vmem:[#allocation2 + $0x240] sm:$0xff]
    %v996 = vld [vmem:[#allocation2 + $0x268] sm:$0xff]
    %997 = vmatprep.subr.mxu0 0.0
    %998 = vmatpush1.msra.mxu0 %v981
    %999 = vmatprep.subr.mxu0 0.0
    %1000 = vmatpush1.msra.mxu0 %v982
    %1001 = vmatprep.subr.mxu0 0.0
    %1002 = vmatpush1.msra.mxu0 %v983
    %1003 = vmatprep.subr.mxu0 0.0
    %1004 = vmatpush1.msra.mxu0 %v984
    %1005 = vmatprep.subr.mxu0 0.0
    %1006 = vmatpush1.msra.mxu0 %v985
    %1007 = vmatprep.subr.mxu0 0.0
    %1008 = vmatpush1.msra.mxu0 %v986
    %1009 = vmatprep.subr.mxu0 0.0
    %1010 = vmatpush1.msra.mxu0 %v987
    %1011 = vmatprep.subr.mxu0 0.0
    %1012 = vmatpush1.msra.mxu0 %v988
    %1013 = vmatprep.subr.mxu0 0.0
    %1014 = vmatpush1.msra.mxu0 %v989
    %1015 = vmatprep.subr.mxu0 0.0
    %1016 = vmatpush1.msra.mxu0 %v990
    %1017 = vmatprep.subr.mxu0 0.0
    %1018 = vmatpush1.msra.mxu0 %v991
    %1019 = vmatprep.subr.mxu0 0.0
    %1020 = vmatpush1.msra.mxu0 %v992
    %1021 = vmatprep.subr.mxu0 0.0
    %1022 = vmatpush1.msra.mxu0 %v993
    %1023 = vmatprep.subr.mxu0 0.0
    %1024 = vmatpush1.msra.mxu0 %v994
    %1025 = vmatprep.subr.mxu0 0.0
    %1026 = vmatpush1.msra.mxu0 %v995
    %1027 = vmatprep.subr.mxu0 0.0
    %1028 = vmatpush1.msra.mxu0 %v996
    %1029 = vmatprep.subr.mxu0 0.0
    %1030 = vmatpush1.msra.mxu0 0.0
    %1031 = vmatprep.subr.mxu0 0.0
    %1032 = vmatpush1.msra.mxu0 0.0
    %1033 = vmatprep.subr.mxu0 0.0
    %1034 = vmatpush1.msra.mxu0 0.0
    %1035 = vmatprep.subr.mxu0 0.0
    %1036 = vmatpush1.msra.mxu0 0.0
    %1037 = vmatprep.subr.mxu0 0.0
    %1038 = vmatpush1.msra.mxu0 0.0
    %1039 = vmatprep.subr.mxu0 0.0
    %1040 = vmatpush1.msra.mxu0 0.0
    %1041 = vmatprep.subr.mxu0 0.0
    %1042 = vmatpush1.msra.mxu0 0.0
    %1043 = vmatprep.subr.mxu0 0.0
    %1044 = vmatpush1.msra.mxu0 0.0
    %1045 = vmatprep.subr.mxu0 0.0
    %1046 = vmatpush1.msra.mxu0 0.0
    %1047 = vmatprep.subr.mxu0 0.0
    %1048 = vmatpush1.msra.mxu0 0.0
    %1049 = vmatprep.subr.mxu0 0.0
    %1050 = vmatpush1.msra.mxu0 0.0
    %1051 = vmatprep.subr.mxu0 0.0
    %1052 = vmatpush1.msra.mxu0 0.0
    %1053 = vmatprep.subr.mxu0 0.0
    %1054 = vmatpush1.msra.mxu0 0.0
    %1055 = vmatprep.subr.mxu0 0.0
    %1056 = vmatpush1.msra.mxu0 0.0
    %1057 = vmatprep.subr.mxu0 0.0
    %1058 = vmatpush1.msra.mxu0 0.0
    %1059 = vmatprep.subr.mxu0 0.0
    %1060 = vmatpush1.msra.mxu0 0.0
    %1061 = vmatprep.mubr.f32.mxu0 0.0
    %1062 = vmatmul.mubr.f32.gmra.mrb[0].mxu0 %v980
    %v1063 = vpop.f32.mrb[0].mxu0
    %v1064 = vadd.f32 0.0, %v1063
    %v1065 = vpop.f32.mrb[0].mxu0
    %1066 = vdwg.mxu0
    %v1067 = vsub.f32 %v980, %v1064
    %v1068 = vmul.f32 %v1067, %v1067
    %1069 = vmatprep.subr.mxu0 0.0
    %1070 = vmatpush1.msra.mxu0 %v981
    %1071 = vmatprep.subr.mxu0 0.0
    %1072 = vmatpush1.msra.mxu0 %v982
    %1073 = vmatprep.subr.mxu0 0.0
    %1074 = vmatpush1.msra.mxu0 %v983
    %1075 = vmatprep.subr.mxu0 0.0
    %1076 = vmatpush1.msra.mxu0 %v984
    %1077 = vmatprep.subr.mxu0 0.0
    %1078 = vmatpush1.msra.mxu0 %v985
    %1079 = vmatprep.subr.mxu0 0.0
    %1080 = vmatpush1.msra.mxu0 %v986
    %1081 = vmatprep.subr.mxu0 0.0
    %1082 = vmatpush1.msra.mxu0 %v987
    %1083 = vmatprep.subr.mxu0 0.0
    %1084 = vmatpush1.msra.mxu0 %v988
    %1085 = vmatprep.subr.mxu0 0.0
    %1086 = vmatpush1.msra.mxu0 %v989
    %1087 = vmatprep.subr.mxu0 0.0
    %1088 = vmatpush1.msra.mxu0 %v990
    %1089 = vmatprep.subr.mxu0 0.0
    %1090 = vmatpush1.msra.mxu0 %v991
    %1091 = vmatprep.subr.mxu0 0.0
    %1092 = vmatpush1.msra.mxu0 %v992
    %1093 = vmatprep.subr.mxu0 0.0
    %1094 = vmatpush1.msra.mxu0 %v993
    %1095 = vmatprep.subr.mxu0 0.0
    %1096 = vmatpush1.msra.mxu0 %v994
    %1097 = vmatprep.subr.mxu0 0.0
    %1098 = vmatpush1.msra.mxu0 %v995
    %1099 = vmatprep.subr.mxu0 0.0
    %1100 = vmatpush1.msra.mxu0 %v996
    %1101 = vmatprep.subr.mxu0 0.0
    %1102 = vmatpush1.msra.mxu0 0.0
    %1103 = vmatprep.subr.mxu0 0.0
    %1104 = vmatpush1.msra.mxu0 0.0
    %1105 = vmatprep.subr.mxu0 0.0
    %1106 = vmatpush1.msra.mxu0 0.0
    %1107 = vmatprep.subr.mxu0 0.0
    %1108 = vmatpush1.msra.mxu0 0.0
    %1109 = vmatprep.subr.mxu0 0.0
    %1110 = vmatpush1.msra.mxu0 0.0
    %1111 = vmatprep.subr.mxu0 0.0
    %1112 = vmatpush1.msra.mxu0 0.0
    %1113 = vmatprep.subr.mxu0 0.0
    %1114 = vmatpush1.msra.mxu0 0.0
    %1115 = vmatprep.subr.mxu0 0.0
    %1116 = vmatpush1.msra.mxu0 0.0
    %1117 = vmatprep.subr.mxu0 0.0
    %1118 = vmatpush1.msra.mxu0 0.0
    %1119 = vmatprep.subr.mxu0 0.0
    %1120 = vmatpush1.msra.mxu0 0.0
    %1121 = vmatprep.subr.mxu0 0.0
    %1122 = vmatpush1.msra.mxu0 0.0
    %1123 = vmatprep.subr.mxu0 0.0
    %1124 = vmatpush1.msra.mxu0 0.0
    %1125 = vmatprep.subr.mxu0 0.0
    %1126 = vmatpush1.msra.mxu0 0.0
    %1127 = vmatprep.subr.mxu0 0.0
    %1128 = vmatpush1.msra.mxu0 0.0
    %1129 = vmatprep.subr.mxu0 0.0
    %1130 = vmatpush1.msra.mxu0 0.0
    %1131 = vmatprep.subr.mxu0 0.0
    %1132 = vmatpush1.msra.mxu0 0.0
    %1133 = vmatprep.mubr.f32.mxu0 0.0
    %1134 = vmatmul.mubr.f32.gmra.mrb[0].mxu0 %v1068
    %v1135 = vpop.f32.mrb[0].mxu0
    %v1136 = vadd.f32 1e-05, %v1135
    %v1137 = vpop.f32.mrb[0].mxu0
    %1138 = vdwg.mxu0
    %v1139 = vrsqrt.pop %v1136
    %v1140 = vmul.f32 %v1067, %v1139
    %v1141 = vld [vmem:[%s5 + $0x6] sm:$0x1]
    %v1142 = vlaneseq
    %v1143 = vshrl.u32 %v1142, 7
    %v1144 = vsub.s32 0, %v1143
    %v1145 = vrot.slane %v1141, %v1144
    %v1146 = vmul.f32 %v1140, %v1145
    %v1147 = vld [vmem:[%s5 + $0x7] sm:$0x1]
    %v1148 = vlaneseq
    %v1149 = vshrl.u32 %v1148, 7
    %v1150 = vsub.s32 0, %v1149
    %v1151 = vrot.slane %v1147, %v1150
    %v1152 = vadd.f32 %v1146, %v1151
    %v1153 = vld [vmem:[#allocation2 + $0x20] sm:$0xff]
    %v1154 = vld [vmem:[#allocation2 + $0x48] sm:$0xff]
    %v1155 = vld [vmem:[#allocation2 + $0x70] sm:$0xff]
    %v1156 = vld [vmem:[#allocation2 + $0x98] sm:$0xff]
    %v1157 = vld [vmem:[#allocation2 + $0xc0] sm:$0xff]
    %v1158 = vld [vmem:[#allocation2 + $0xe8] sm:$0xff]
    %v1159 = vld [vmem:[#allocation2 + $0x110] sm:$0xff]
    %v1160 = vld [vmem:[#allocation2 + $0x138] sm:$0xff]
    %v1161 = vld [vmem:[#allocation2 + $0x160] sm:$0xff]
    %v1162 = vld [vmem:[#allocation2 + $0x188] sm:$0xff]
    %v1163 = vld [vmem:[#allocation2 + $0x1b0] sm:$0xff]
    %v1164 = vld [vmem:[#allocation2 + $0x1d8] sm:$0xff]
    %v1165 = vld [vmem:[#allocation2 + $0x200] sm:$0xff]
    %v1166 = vld [vmem:[#allocation2 + $0x228] sm:$0xff]
    %v1167 = vld [vmem:[#allocation2 + $0x250] sm:$0xff]
    %v1168 = vld [vmem:[#allocation2 + $0x278] sm:$0xff]
    %v1169 = vld [vmem:[%s5 + $0x8] sm:$0x1]
    %v1170 = vlaneseq
    %v1171 = vshrl.u32 %v1170, 7
    %v1172 = vsub.s32 0, %v1171
    %v1173 = vrot.slane %v1169, %v1172
    %1174 = vmatprep.subr.mxu0 0.0
    %1175 = vmatpush1.msra.mxu0 %v1153
    %1176 = vmatprep.subr.mxu0 0.0
    %1177 = vmatpush1.msra.mxu0 %v1154
    %1178 = vmatprep.subr.mxu0 0.0
    %1179 = vmatpush1.msra.mxu0 %v1155
    %1180 = vmatprep.subr.mxu0 0.0
    %1181 = vmatpush1.msra.mxu0 %v1156
    %1182 = vmatprep.subr.mxu0 0.0
    %1183 = vmatpush1.msra.mxu0 %v1157
    %1184 = vmatprep.subr.mxu0 0.0
    %1185 = vmatpush1.msra.mxu0 %v1158
    %1186 = vmatprep.subr.mxu0 0.0
    %1187 = vmatpush1.msra.mxu0 %v1159
    %1188 = vmatprep.subr.mxu0 0.0
    %1189 = vmatpush1.msra.mxu0 %v1160
    %1190 = vmatprep.subr.mxu0 0.0
    %1191 = vmatpush1.msra.mxu0 %v1161
    %1192 = vmatprep.subr.mxu0 0.0
    %1193 = vmatpush1.msra.mxu0 %v1162
    %1194 = vmatprep.subr.mxu0 0.0
    %1195 = vmatpush1.msra.mxu0 %v1163
    %1196 = vmatprep.subr.mxu0 0.0
    %1197 = vmatpush1.msra.mxu0 %v1164
    %1198 = vmatprep.subr.mxu0 0.0
    %1199 = vmatpush1.msra.mxu0 %v1165
    %1200 = vmatprep.subr.mxu0 0.0
    %1201 = vmatpush1.msra.mxu0 %v1166
    %1202 = vmatprep.subr.mxu0 0.0
    %1203 = vmatpush1.msra.mxu0 %v1167
    %1204 = vmatprep.subr.mxu0 0.0
    %1205 = vmatpush1.msra.mxu0 %v1168
    %1206 = vmatprep.subr.mxu0 0.0
    %1207 = vmatpush1.msra.mxu0 0.0
    %1208 = vmatprep.subr.mxu0 0.0
    %1209 = vmatpush1.msra.mxu0 0.0
    %1210 = vmatprep.subr.mxu0 0.0
    %1211 = vmatpush1.msra.mxu0 0.0
    %1212 = vmatprep.subr.mxu0 0.0
    %1213 = vmatpush1.msra.mxu0 0.0
    %1214 = vmatprep.subr.mxu0 0.0
    %1215 = vmatpush1.msra.mxu0 0.0
    %1216 = vmatprep.subr.mxu0 0.0
    %1217 = vmatpush1.msra.mxu0 0.0
    %1218 = vmatprep.subr.mxu0 0.0
    %1219 = vmatpush1.msra.mxu0 0.0
    %1220 = vmatprep.subr.mxu0 0.0
    %1221 = vmatpush1.msra.mxu0 0.0
    %1222 = vmatprep.subr.mxu0 0.0
    %1223 = vmatpush1.msra.mxu0 0.0
    %1224 = vmatprep.subr.mxu0 0.0
    %1225 = vmatpush1.msra.mxu0 0.0
    %1226 = vmatprep.subr.mxu0 0.0
    %1227 = vmatpush1.msra.mxu0 0.0
    %1228 = vmatprep.subr.mxu0 0.0
    %1229 = vmatpush1.msra.mxu0 0.0
    %1230 = vmatprep.subr.mxu0 0.0
    %1231 = vmatpush1.msra.mxu0 0.0
    %1232 = vmatprep.subr.mxu0 0.0
    %1233 = vmatpush1.msra.mxu0 0.0
    %1234 = vmatprep.subr.mxu0 0.0
    %1235 = vmatpush1.msra.mxu0 0.0
    %1236 = vmatprep.subr.mxu0 0.0
    %1237 = vmatpush1.msra.mxu0 0.0
    %1238 = vmatprep.mubr.f32.mxu0 0.0
    %1239 = vmatmul.mubr.f32.gmra.mrb[0].mxu0 %v1152
    %v1240 = vpop.f32.mrb[0].mxu0
    %v1241 = vadd.f32 %v1173, %v1240
    %v1242 = vpop.f32.mrb[0].mxu0
    %1243 = vdwg.mxu0
    %v1244 = vmul.f32 %v1241, 0.5
    %v1245 = vmul.f32 %v1241, 0.70710677
    %v1246 = verf.f32.pop %v1245
    %v1247 = vadd.f32 %v1246, 1.0
    %v1248 = vmul.f32 %v1244, %v1247
    %v1249 = vld [vmem:[#allocation4 + $0x80] sm:$0xff]
    %v1250 = vld [vmem:[#allocation4 + $0x88] sm:$0xff]
    %v1251 = vld [vmem:[#allocation4 + $0x90] sm:$0xff]
    %v1252 = vld [vmem:[#allocation4 + $0x98] sm:$0xff]
    %v1253 = vld [vmem:[#allocation4 + $0xa0] sm:$0xff]
    %v1254 = vld [vmem:[#allocation4 + $0xa8] sm:$0xff]
    %v1255 = vld [vmem:[#allocation4 + $0xb0] sm:$0xff]
    %v1256 = vld [vmem:[#allocation4 + $0xb8] sm:$0xff]
    %v1257 = vld [vmem:[#allocation4 + $0xc0] sm:$0xff]
    %v1258 = vld [vmem:[#allocation4 + $0xc8] sm:$0xff]
    %v1259 = vld [vmem:[#allocation4 + $0xd0] sm:$0xff]
    %v1260 = vld [vmem:[#allocation4 + $0xd8] sm:$0xff]
    %v1261 = vld [vmem:[#allocation4 + $0xe0] sm:$0xff]
    %v1262 = vld [vmem:[#allocation4 + $0xe8] sm:$0xff]
    %v1263 = vld [vmem:[#allocation4 + $0xf0] sm:$0xff]
    %v1264 = vld [vmem:[#allocation4 + $0xf8] sm:$0xff]
    %v1265 = vld [vmem:[%s5 + $0x9] sm:$0x1]
    %v1266 = vlaneseq
    %v1267 = vshrl.u32 %v1266, 7
    %v1268 = vsub.s32 0, %v1267
    %v1269 = vrot.slane %v1265, %v1268
    %1270 = vmatprep.subr.mxu0 0.0
    %1271 = vmatpush1.msra.mxu0 %v1249
    %1272 = vmatprep.subr.mxu0 0.0
    %1273 = vmatpush1.msra.mxu0 %v1250
    %1274 = vmatprep.subr.mxu0 0.0
    %1275 = vmatpush1.msra.mxu0 %v1251
    %1276 = vmatprep.subr.mxu0 0.0
    %1277 = vmatpush1.msra.mxu0 %v1252
    %1278 = vmatprep.subr.mxu0 0.0
    %1279 = vmatpush1.msra.mxu0 %v1253
    %1280 = vmatprep.subr.mxu0 0.0
    %1281 = vmatpush1.msra.mxu0 %v1254
    %1282 = vmatprep.subr.mxu0 0.0
    %1283 = vmatpush1.msra.mxu0 %v1255
    %1284 = vmatprep.subr.mxu0 0.0
    %1285 = vmatpush1.msra.mxu0 %v1256
    %1286 = vmatprep.subr.mxu0 0.0
    %1287 = vmatpush1.msra.mxu0 %v1257
    %1288 = vmatprep.subr.mxu0 0.0
    %1289 = vmatpush1.msra.mxu0 %v1258
    %1290 = vmatprep.subr.mxu0 0.0
    %1291 = vmatpush1.msra.mxu0 %v1259
    %1292 = vmatprep.subr.mxu0 0.0
    %1293 = vmatpush1.msra.mxu0 %v1260
    %1294 = vmatprep.subr.mxu0 0.0
    %1295 = vmatpush1.msra.mxu0 %v1261
    %1296 = vmatprep.subr.mxu0 0.0
    %1297 = vmatpush1.msra.mxu0 %v1262
    %1298 = vmatprep.subr.mxu0 0.0
    %1299 = vmatpush1.msra.mxu0 %v1263
    %1300 = vmatprep.subr.mxu0 0.0
    %1301 = vmatpush1.msra.mxu0 %v1264
    %1302 = vmatprep.subr.mxu0 0.0
    %1303 = vmatpush1.msra.mxu0 0.0
    %1304 = vmatprep.subr.mxu0 0.0
    %1305 = vmatpush1.msra.mxu0 0.0
    %1306 = vmatprep.subr.mxu0 0.0
    %1307 = vmatpush1.msra.mxu0 0.0
    %1308 = vmatprep.subr.mxu0 0.0
    %1309 = vmatpush1.msra.mxu0 0.0
    %1310 = vmatprep.subr.mxu0 0.0
    %1311 = vmatpush1.msra.mxu0 0.0
    %1312 = vmatprep.subr.mxu0 0.0
    %1313 = vmatpush1.msra.mxu0 0.0
    %1314 = vmatprep.subr.mxu0 0.0
    %1315 = vmatpush1.msra.mxu0 0.0
    %1316 = vmatprep.subr.mxu0 0.0
    %1317 = vmatpush1.msra.mxu0 0.0
    %1318 = vmatprep.subr.mxu0 0.0
    %1319 = vmatpush1.msra.mxu0 0.0
    %1320 = vmatprep.subr.mxu0 0.0
    %1321 = vmatpush1.msra.mxu0 0.0
    %1322 = vmatprep.subr.mxu0 0.0
    %1323 = vmatpush1.msra.mxu0 0.0
    %1324 = vmatprep.subr.mxu0 0.0
    %1325 = vmatpush1.msra.mxu0 0.0
    %1326 = vmatprep.subr.mxu0 0.0
    %1327 = vmatpush1.msra.mxu0 0.0
    %1328 = vmatprep.subr.mxu0 0.0
    %1329 = vmatpush1.msra.mxu0 0.0
    %1330 = vmatprep.subr.mxu0 0.0
    %1331 = vmatpush1.msra.mxu0 0.0
    %1332 = vmatprep.subr.mxu0 0.0
    %1333 = vmatpush1.msra.mxu0 0.0
    %1334 = vmatprep.mubr.f32.mxu0 0.0
    %1335 = vmatmul.mubr.f32.gmra.mrb[0].mxu0 %v1248
    %v1336 = vpop.f32.mrb[0].mxu0
    %v1337 = vadd.f32 %v1269, %v1336
    %v1338 = vpop.f32.mrb[0].mxu0
    %1339 = vdwg.mxu0
    %v1340 = vadd.f32 %v980, %v1337
    %v1341 = vadd.f32 %v57, %v487
    %v1342 = vxor.u32 %v1340, 2147483648
    %v1343 = vmul.f32 %v1342, 1.442695
    %v1344 = vpow.pop %v1343
    %v1345 = vadd.f32 %v1344, 1.0
    %v1346 = vrcp.pop %v1345
    %v1347 = vmul.f32 1.0, %v1346
    %v1348 = vmul.f32 %v1340, %v1347
    %v1349 = vadd.f32 %v1341, %v1348
    %1350 = vst [vmem:[%s8] sm:$0x3] %v1349
    // Predicated region
    $region42: #{conv_mixer_block.1} parent=1 // pred_check
      _
    $region43: #{conv_mixer_block.1} parent=1 // pred_check_branch
      %1352 = sbr.rel (0) target = $region45
    $region44: #{conv_mixer_block.1} parent=1 // pred_region
      _
    $region45: #{conv_mixer_block.1} parent=1 // pred_fallthru
      _
    // Predicated region
    $region46: #{conv_mixer_block.1} parent=1 // pred_check
      _
    $region47: #{conv_mixer_block.1} parent=1 // pred_check_branch
      %1354 = sbr.rel (0) target = $region49
    $region48: #{conv_mixer_block.1} parent=1 // pred_region
      _
    $region49: #{conv_mixer_block.1} parent=1 // pred_fallthru
      _
    %1355 = vsyncpa [#allocation3], 1
    %1356 = vsyncpa [#allocation5], 1

</llo_original>
